<compile_context>
chip_gen: v6e
topology: v6e:2x2x1
jax: 0.10.0
libtpu: 0.0.40
codegen_flags: <defaults>
</compile_context>

<pallas_src>
import functools

import jax
import jax.numpy as jnp
from jax.experimental import pallas as pl
from jax.experimental.pallas import tpu as pltpu


# ----------------------------------------------------------------------------
# In-kernel helpers (channel-major conv: feat is (Cin, M) with M = H*W pixels)
# ----------------------------------------------------------------------------
def _shift_flat(x, d):
    """y[:, p] = x[:, p + d], zero-filled at the flat ends.  d is static."""
    m = x.shape[1]
    if d == 0:
        return x
    if abs(d) >= m:
        return jnp.zeros_like(x)
    pad = jnp.zeros((x.shape[0], abs(d)), x.dtype)
    if d > 0:
        return jnp.concatenate([x[:, d:], pad], axis=1)
    return jnp.concatenate([pad, x[:, :d]], axis=1)


def _conv3x3(feat, wT, b, lmask, rmask, W):
    """3x3 'SAME' convolution as a single channel-major MXU GEMM.

    feat   : (Cin, M) activations, M = H*W flat pixels (lane-dense)
    wT     : (Cout, 9*Cin) folded weights; K index = ((dy+1)*3 + (dx+1))*Cin + ci
    b      : (Cout, 1) bias
    lmask  : (1, M) bool, True where the output pixel has a left  neighbour
    rmask  : (1, M) bool, True where the output pixel has a right neighbour
    returns: (Cout, M) float32
    """
    taps = []
    for dy in (-1, 0, 1):
        for dx in (-1, 0, 1):
            t = _shift_flat(feat, dy * W + dx)
            # Flat zero-fill already covers rows falling off the top/bottom of
            # the image; only column wrap-around needs masking.
            if dx == -1:
                t = jnp.where(lmask, t, 0.0)
            elif dx == 1:
                t = jnp.where(rmask, t, 0.0)
            taps.append(t)
    patch = jnp.concatenate(taps, axis=0)                      # (9*Cin, M)
    acc = jnp.dot(wT, patch, preferred_element_type=jnp.float32)
    return acc + b                                             # (Cout, M) f32


# ----------------------------------------------------------------------------
# Fused kernel: input conv + LeakyReLU + num_blocks residual blocks
# ----------------------------------------------------------------------------
def _fused_kernel(x_ref, w0_ref, b0_ref, wb_ref, bb_ref, o_ref,
                  *, H, W, cin, C, nb):
    M = H * W

    # dx-tap column-validity masks, built once and reused by every conv.
    col = jax.lax.broadcasted_iota(jnp.int32, (1, M), 1) % W
    lmask = col > 0
    rmask = col < (W - 1)

    # Input conv (cin -> C) + LeakyReLU(0.1).  All math in f32.
    x = x_ref[0].astype(jnp.float32)                           # (cin, M)
    f = _conv3x3(x, w0_ref[...], b0_ref[...], lmask, rmask, W)  # (C, M)
    f = jnp.where(f >= 0, f, 0.1 * f)

    # num_blocks x ResidualBlockNoBN; the feature map never leaves the chip.
    def block(i, f):
        y = _conv3x3(f, wb_ref[2 * i], bb_ref[2 * i], lmask, rmask, W)
        y = jnp.maximum(y, 0.0)
        y = _conv3x3(y, wb_ref[2 * i + 1], bb_ref[2 * i + 1], lmask, rmask, W)
        return f + y

    f = jax.lax.fori_loop(0, nb, block, f)

    o_ref[0] = f.astype(o_ref.dtype)                           # lane-dense (C, M)


# ----------------------------------------------------------------------------
# pallas_call wrapper
# ----------------------------------------------------------------------------
def _vmem_limit_bytes():
    """Per-generation VMEM budget (128 MiB on v5e/v6e, 64 MiB per TC on v7x)."""
    try:
        cap = pltpu.get_tpu_info().vmem_capacity_bytes
        return int(cap * 0.85)
    except Exception:
        return 64 * 1024 * 1024


def _fused_call(x2, w0, b0, wb, bb, *, N, H, W, cin, C, nb):
    M = H * W
    kernel = functools.partial(_fused_kernel, H=H, W=W, cin=cin, C=C, nb=nb)

    def nbytes(a):
        return a.size * a.dtype.itemsize

    flops = 2 * N * M * 9 * cin * C + 4 * nb * N * M * 9 * C * C
    cost = pl.CostEstimate(
        flops=flops, transcendentals=0,
        bytes_accessed=(nbytes(x2) + N * C * M * x2.dtype.itemsize
                        + nbytes(w0) + nbytes(b0) + nbytes(wb) + nbytes(bb)))

    return pl.pallas_call(
        kernel,
        out_shape=jax.ShapeDtypeStruct((N, C, M), x2.dtype),
        grid=(N,),
        in_specs=[
            pl.BlockSpec((1, cin, M), lambda n: (n, 0, 0)),          # x
            pl.BlockSpec((C, 9 * cin), lambda n: (0, 0)),            # w0^T
            pl.BlockSpec((C, 1), lambda n: (0, 0)),                  # b0
            pl.BlockSpec((2 * nb, C, 9 * C), lambda n: (0, 0, 0)),   # block w^T
            pl.BlockSpec((2 * nb, C, 1), lambda n: (0, 0, 0)),       # block b
        ],
        out_specs=pl.BlockSpec((1, C, M), lambda n: (n, 0, 0)),
        compiler_params=pltpu.CompilerParams(
            dimension_semantics=("parallel",),
            vmem_limit_bytes=_vmem_limit_bytes()),
        cost_estimate=cost,
    )(x2, w0, b0, wb, bb)


def residual_blocks_with_input_conv(feat_nchw, params):
    """Forward pass: (n, in_channels, h, w) -> (n, out_channels, h, w)."""
    N, cin, H, W = feat_nchw.shape
    C = params["w0"].shape[0]
    nb = params["wb"].shape[0] // 2
    x2 = feat_nchw.reshape(N, cin, H * W)            # free view (NCHW is C-major)
    out = _fused_call(
        x2, params["w0"], params["b0"].reshape(C, 1),
        params["wb"], params["bb"].reshape(2 * nb, C, 1),
        N=N, H=H, W=W, cin=cin, C=C, nb=nb)
    return out.reshape(N, C, H, W)                   # free view


# ----------------------------------------------------------------------------
# Parameters (PyTorch-Conv2d-like uniform fan-in init), stored pre-folded and
# pre-transposed as (Cout, 9*Cin) for the channel-major GEMM.
# ----------------------------------------------------------------------------
def _conv_init(key, cin, cout):
    kw, kb = jax.random.split(key)
    bound = 1.0 / float((cin * 9) ** 0.5)
    w = jax.random.uniform(kw, (3, 3, cin, cout), jnp.float32, -bound, bound)
    b = jax.random.uniform(kb, (cout,), jnp.float32, -bound, bound)
    wT = jnp.transpose(w, (3, 0, 1, 2)).reshape(cout, 9 * cin)   # (Cout, 9*Cin)
    return wT, b


def init_params(key, in_channels, out_channels, num_blocks):
    keys = jax.random.split(key, 1 + 2 * num_blocks)
    w0, b0 = _conv_init(keys[0], in_channels, out_channels)
    wbs, bbs = [], []
    for i in range(num_blocks):
        w1, b1 = _conv_init(keys[1 + 2 * i], out_channels, out_channels)
        w2, b2 = _conv_init(keys[2 + 2 * i], out_channels, out_channels)
        wbs += [w1, w2]
        bbs += [b1, b2]
    return {
        "w0": w0, "b0": b0,
        "wb": jnp.stack(wbs, axis=0),          # (2*num_blocks, C, 9*C)
        "bb": jnp.stack(bbs, axis=0),          # (2*num_blocks, C)
    }


# ----------------------------------------------------------------------------
# Pure-JAX reference (for correctness check)
# ----------------------------------------------------------------------------
def _ref_conv(x_nchw, wT, b):
    cout, k = wT.shape
    cin = k // 9
    w = jnp.transpose(wT.reshape(cout, 3, 3, cin), (1, 2, 3, 0))   # HWIO
    y = jax.lax.conv_general_dilated(
        x_nchw, w, window_strides=(1, 1), padding="SAME",
        dimension_numbers=("NCHW", "HWIO", "NCHW"),
        precision=jax.lax.Precision.HIGHEST)
    return y + b[None, :, None, None]


def reference_forward(feat_nchw, params):
    x = _ref_conv(feat_nchw, params["w0"], params["b0"])
    x = jnp.where(x >= 0, x, 0.1 * x)
    nb = params["wb"].shape[0] // 2
    for i in range(nb):
        y = jnp.maximum(
            _ref_conv(x, params["wb"][2 * i], params["bb"][2 * i]), 0.0)
        x = x + _ref_conv(y, params["wb"][2 * i + 1], params["bb"][2 * i + 1])
    return x


if __name__ == "__main__":
    N, IN_C, OUT_C, H, W = 2, 4, 32, 16, 16
    NUM_BLOCKS = 2

    key = jax.random.PRNGKey(0)
    k_feat, k_params, k_feat2, k_feat3 = jax.random.split(key, 4)
    params = init_params(k_params, IN_C, OUT_C, NUM_BLOCKS)

    fwd = jax.jit(residual_blocks_with_input_conv)
    ref_fwd = jax.jit(reference_forward)

    # Main shape consistent with the module's (n, in_channels, h, w) input.
    feat = jax.random.normal(k_feat, (N, IN_C, H, W), jnp.float32)
    out = jax.block_until_ready(fwd(feat, params))
    assert out.shape == (N, OUT_C, H, W), out.shape
    ref = jax.block_until_ready(ref_fwd(feat, params))
    assert jnp.allclose(out, ref, atol=2e-4, rtol=2e-4), \
        float(jnp.max(jnp.abs(out - ref)))

    # Extra coverage: H*W = 384 (different pixel count, N = 1).
    feat2 = jax.random.normal(k_feat2, (1, IN_C, 24, 16), jnp.float32)
    out2 = jax.block_until_ready(fwd(feat2, params))
    ref2 = ref_fwd(feat2, params)
    assert jnp.allclose(out2, ref2, atol=2e-4, rtol=2e-4), \
        float(jnp.max(jnp.abs(out2 - ref2)))

    # Extra coverage: odd spatial sizes, H*W = 45 < 128 (masked-lane path).
    feat3 = jax.random.normal(k_feat3, (1, IN_C, 5, 9), jnp.float32)
    out3 = jax.block_until_ready(fwd(feat3, params))
    ref3 = ref_fwd(feat3, params)
    assert jnp.allclose(out3, ref3, atol=2e-4, rtol=2e-4), \
        float(jnp.max(jnp.abs(out3 - ref3)))

    print("KERNEL_OK")
</pallas_src>

<mosaic_0001>
module attributes {stable_mosaic.version = 11 : i64} {
  func.func @_fused_kernel(%arg0: i32, %arg1: memref<1x4x256xf32, #tpu.memory_space<vmem>>, %arg2: memref<32x36xf32, #tpu.memory_space<vmem>>, %arg3: memref<32x1xf32, #tpu.memory_space<vmem>>, %arg4: memref<4x32x288xf32, #tpu.memory_space<vmem>>, %arg5: memref<4x32x1xf32, #tpu.memory_space<vmem>>, %arg6: memref<1x32x256xf32, #tpu.memory_space<vmem>>) attributes {dimension_semantics = [#tpu.dimension_semantics<parallel>], iteration_bounds = array<i64: 2>, scalar_prefetch = 0 : i64, scratch_operands = 0 : i64, tpu.core_type = #tpu.core_type<tc>, window_params = [{transform_indices = @transform_0, window_bounds = array<i64: 1, 4, 256>}, {pipeline_mode = #tpu.pipeline_mode<synchronous>, transform_indices = @transform_1, window_bounds = array<i64: 32, 36>}, {pipeline_mode = #tpu.pipeline_mode<synchronous>, transform_indices = @transform_2, window_bounds = array<i64: 32, 1>}, {pipeline_mode = #tpu.pipeline_mode<synchronous>, transform_indices = @transform_3, window_bounds = array<i64: 4, 32, 288>}, {pipeline_mode = #tpu.pipeline_mode<synchronous>, transform_indices = @transform_4, window_bounds = array<i64: 4, 32, 1>}, {transform_indices = @transform_5, window_bounds = array<i64: 1, 32, 256>}]} {
    %0 = tpu.iota {dimensions = array<i32: 1>} : vector<1x256xi32>
    %c16_i32 = arith.constant 16 : i32
    %c0_i32 = arith.constant 0 : i32
    %1 = arith.cmpi eq, %c16_i32, %c0_i32 : i32
    %c1_i32 = arith.constant 1 : i32
    %2 = arith.select %1, %c1_i32, %c16_i32 : i32
    %3 = vector.broadcast %2 : i32 to vector<1x256xi32>
    %4 = arith.remsi %0, %3 : vector<1x256xi32>
    %c0_i32_0 = arith.constant 0 : i32
    %5 = vector.broadcast %c0_i32_0 : i32 to vector<1x256xi32>
    %6 = arith.cmpi ne, %4, %5 : vector<1x256xi32>
    %c0_i32_1 = arith.constant 0 : i32
    %7 = vector.broadcast %c0_i32_1 : i32 to vector<1x256xi32>
    %8 = arith.cmpi slt, %4, %7 : vector<1x256xi32>
    %c0_i32_2 = arith.constant 0 : i32
    %9 = arith.cmpi slt, %2, %c0_i32_2 : i32
    %10 = vector.broadcast %9 : i1 to vector<1x256xi1>
    %11 = vector.broadcast %10 : vector<1x256xi1> to vector<1x256xi1>
    %12 = arith.xori %8, %11 : vector<1x256xi1>
    %13 = arith.andi %12, %6 : vector<1x256xi1>
    %14 = vector.broadcast %2 : i32 to vector<1x256xi32>
    %15 = arith.addi %4, %14 : vector<1x256xi32>
    %16 = arith.select %13, %15, %4 : vector<1x256xi1>, vector<1x256xi32>
    %c0_i32_3 = arith.constant 0 : i32
    %17 = vector.broadcast %c0_i32_3 : i32 to vector<1x256xi32>
    %18 = arith.cmpi sgt, %16, %17 : vector<1x256xi32>
    %c15_i32 = arith.constant 15 : i32
    %19 = vector.broadcast %c15_i32 : i32 to vector<1x256xi32>
    %20 = arith.cmpi slt, %16, %19 : vector<1x256xi32>
    %c0 = arith.constant 0 : index
    %c0_4 = arith.constant 0 : index
    %c0_5 = arith.constant 0 : index
    %21 = vector.load %arg1[%c0, %c0_4, %c0_5] : memref<1x4x256xf32, #tpu.memory_space<vmem>>, vector<1x4x256xf32>
    %22 = vector.shape_cast %21 : vector<1x4x256xf32> to vector<4x256xf32>
    %c0_6 = arith.constant 0 : index
    %c0_7 = arith.constant 0 : index
    %23 = vector.load %arg2[%c0_6, %c0_7] : memref<32x36xf32, #tpu.memory_space<vmem>>, vector<32x36xf32>
    %c0_8 = arith.constant 0 : index
    %c0_9 = arith.constant 0 : index
    %24 = vector.load %arg3[%c0_8, %c0_9] : memref<32x1xf32, #tpu.memory_space<vmem>>, vector<32x1xf32>
    %cst = arith.constant 0.000000e+00 : f32
    %25 = vector.broadcast %cst : f32 to vector<4x17xf32>
    %26 = vector.extract_strided_slice %22 {offsets = [0, 0], sizes = [4, 239], strides = [1, 1]} : vector<4x256xf32> to vector<4x239xf32>
    %27 = tpu.concatenate %25, %26 in 1 : vector<4x17xf32>, vector<4x239xf32> -> vector<4x256xf32>
    %cst_10 = arith.constant 0.000000e+00 : f32
    %28 = vector.shape_cast %18 : vector<1x256xi1> to vector<1x256xi1>
    %29 = vector.broadcast %28 : vector<1x256xi1> to vector<4x256xi1>
    %30 = vector.broadcast %cst_10 : f32 to vector<4x256xf32>
    %31 = arith.select %29, %27, %30 : vector<4x256xi1>, vector<4x256xf32>
    %cst_11 = arith.constant 0.000000e+00 : f32
    %32 = vector.broadcast %cst_11 : f32 to vector<4x16xf32>
    %33 = vector.extract_strided_slice %22 {offsets = [0, 0], sizes = [4, 240], strides = [1, 1]} : vector<4x256xf32> to vector<4x240xf32>
    %34 = tpu.concatenate %32, %33 in 1 : vector<4x16xf32>, vector<4x240xf32> -> vector<4x256xf32>
    %cst_12 = arith.constant 0.000000e+00 : f32
    %35 = vector.broadcast %cst_12 : f32 to vector<4x15xf32>
    %36 = vector.extract_strided_slice %22 {offsets = [0, 0], sizes = [4, 241], strides = [1, 1]} : vector<4x256xf32> to vector<4x241xf32>
    %37 = tpu.concatenate %35, %36 in 1 : vector<4x15xf32>, vector<4x241xf32> -> vector<4x256xf32>
    %cst_13 = arith.constant 0.000000e+00 : f32
    %38 = vector.shape_cast %20 : vector<1x256xi1> to vector<1x256xi1>
    %39 = vector.broadcast %38 : vector<1x256xi1> to vector<4x256xi1>
    %40 = vector.broadcast %cst_13 : f32 to vector<4x256xf32>
    %41 = arith.select %39, %37, %40 : vector<4x256xi1>, vector<4x256xf32>
    %cst_14 = arith.constant 0.000000e+00 : f32
    %42 = vector.broadcast %cst_14 : f32 to vector<4x1xf32>
    %43 = vector.extract_strided_slice %22 {offsets = [0, 0], sizes = [4, 255], strides = [1, 1]} : vector<4x256xf32> to vector<4x255xf32>
    %44 = tpu.concatenate %42, %43 in 1 : vector<4x1xf32>, vector<4x255xf32> -> vector<4x256xf32>
    %cst_15 = arith.constant 0.000000e+00 : f32
    %45 = vector.shape_cast %18 : vector<1x256xi1> to vector<1x256xi1>
    %46 = vector.broadcast %45 : vector<1x256xi1> to vector<4x256xi1>
    %47 = vector.broadcast %cst_15 : f32 to vector<4x256xf32>
    %48 = arith.select %46, %44, %47 : vector<4x256xi1>, vector<4x256xf32>
    %cst_16 = arith.constant 0.000000e+00 : f32
    %49 = vector.broadcast %cst_16 : f32 to vector<4x1xf32>
    %50 = vector.extract_strided_slice %22 {offsets = [0, 1], sizes = [4, 255], strides = [1, 1]} : vector<4x256xf32> to vector<4x255xf32>
    %51 = tpu.concatenate %50, %49 in 1 : vector<4x255xf32>, vector<4x1xf32> -> vector<4x256xf32>
    %cst_17 = arith.constant 0.000000e+00 : f32
    %52 = vector.shape_cast %20 : vector<1x256xi1> to vector<1x256xi1>
    %53 = vector.broadcast %52 : vector<1x256xi1> to vector<4x256xi1>
    %54 = vector.broadcast %cst_17 : f32 to vector<4x256xf32>
    %55 = arith.select %53, %51, %54 : vector<4x256xi1>, vector<4x256xf32>
    %cst_18 = arith.constant 0.000000e+00 : f32
    %56 = vector.broadcast %cst_18 : f32 to vector<4x15xf32>
    %57 = vector.extract_strided_slice %22 {offsets = [0, 15], sizes = [4, 241], strides = [1, 1]} : vector<4x256xf32> to vector<4x241xf32>
    %58 = tpu.concatenate %57, %56 in 1 : vector<4x241xf32>, vector<4x15xf32> -> vector<4x256xf32>
    %cst_19 = arith.constant 0.000000e+00 : f32
    %59 = vector.shape_cast %18 : vector<1x256xi1> to vector<1x256xi1>
    %60 = vector.broadcast %59 : vector<1x256xi1> to vector<4x256xi1>
    %61 = vector.broadcast %cst_19 : f32 to vector<4x256xf32>
    %62 = arith.select %60, %58, %61 : vector<4x256xi1>, vector<4x256xf32>
    %cst_20 = arith.constant 0.000000e+00 : f32
    %63 = vector.broadcast %cst_20 : f32 to vector<4x16xf32>
    %64 = vector.extract_strided_slice %22 {offsets = [0, 16], sizes = [4, 240], strides = [1, 1]} : vector<4x256xf32> to vector<4x240xf32>
    %65 = tpu.concatenate %64, %63 in 1 : vector<4x240xf32>, vector<4x16xf32> -> vector<4x256xf32>
    %cst_21 = arith.constant 0.000000e+00 : f32
    %66 = vector.broadcast %cst_21 : f32 to vector<4x17xf32>
    %67 = vector.extract_strided_slice %22 {offsets = [0, 17], sizes = [4, 239], strides = [1, 1]} : vector<4x256xf32> to vector<4x239xf32>
    %68 = tpu.concatenate %67, %66 in 1 : vector<4x239xf32>, vector<4x17xf32> -> vector<4x256xf32>
    %cst_22 = arith.constant 0.000000e+00 : f32
    %69 = vector.shape_cast %20 : vector<1x256xi1> to vector<1x256xi1>
    %70 = vector.broadcast %69 : vector<1x256xi1> to vector<4x256xi1>
    %71 = vector.broadcast %cst_22 : f32 to vector<4x256xf32>
    %72 = arith.select %70, %68, %71 : vector<4x256xi1>, vector<4x256xf32>
    %73 = tpu.concatenate %31, %34, %41, %48, %22, %55, %62, %65, %72 in 0 : vector<4x256xf32>, vector<4x256xf32>, vector<4x256xf32>, vector<4x256xf32>, vector<4x256xf32>, vector<4x256xf32>, vector<4x256xf32>, vector<4x256xf32>, vector<4x256xf32> -> vector<36x256xf32>
    %cst_23 = arith.constant dense<0.000000e+00> : vector<32x256xf32>
    %74 = tpu.matmul %23, %73, %cst_23 {dimension_numbers = #tpu.dot_dimension_numbers<[1], [0], [0], [1], [0, 0, 1, 1], [], []>} : vector<32x36xf32>, vector<36x256xf32>, vector<32x256xf32> -> vector<32x256xf32>
    %75 = vector.broadcast %24 : vector<32x1xf32> to vector<32x256xf32>
    %76 = arith.addf %74, %75 : vector<32x256xf32>
    %cst_24 = arith.constant 0.000000e+00 : f32
    %77 = vector.broadcast %cst_24 : f32 to vector<32x256xf32>
    %78 = arith.cmpf oge, %76, %77 : vector<32x256xf32>
    %cst_25 = arith.constant 1.000000e-01 : f32
    %79 = vector.broadcast %cst_25 : f32 to vector<32x256xf32>
    %80 = arith.mulf %79, %76 : vector<32x256xf32>
    %81 = arith.select %78, %76, %80 : vector<32x256xi1>, vector<32x256xf32>
    %c0_i32_26 = arith.constant 0 : i32
    %c2_i32 = arith.constant 2 : i32
    %82 = arith.addi %c0_i32_26, %c2_i32 : i32
    %c1_i32_27 = arith.constant 1 : i32
    %83 = scf.for %arg7 = %c0_i32_26 to %82 step %c1_i32_27 iter_args(%arg8 = %81) -> (vector<32x256xf32>)  : i32 {
      %c2_i32_32 = arith.constant 2 : i32
      %87 = arith.muli %c2_i32_32, %arg7 : i32
      %88 = arith.index_cast %87 : i32 to index
      %c0_33 = arith.constant 0 : index
      %c0_34 = arith.constant 0 : index
      %89 = vector.load %arg4[%88, %c0_33, %c0_34] : memref<4x32x288xf32, #tpu.memory_space<vmem>>, vector<1x32x288xf32>
      %90 = vector.shape_cast %89 : vector<1x32x288xf32> to vector<32x288xf32>
      %c2_i32_35 = arith.constant 2 : i32
      %91 = arith.muli %c2_i32_35, %arg7 : i32
      %92 = arith.index_cast %91 : i32 to index
      %c0_36 = arith.constant 0 : index
      %c0_37 = arith.constant 0 : index
      %93 = vector.load %arg5[%92, %c0_36, %c0_37] : memref<4x32x1xf32, #tpu.memory_space<vmem>>, vector<1x32x1xf32>
      %94 = vector.shape_cast %93 : vector<1x32x1xf32> to vector<32x1xf32>
      %cst_38 = arith.constant 0.000000e+00 : f32
      %95 = vector.broadcast %cst_38 : f32 to vector<32x17xf32>
      %96 = vector.extract_strided_slice %arg8 {offsets = [0, 0], sizes = [32, 239], strides = [1, 1]} : vector<32x256xf32> to vector<32x239xf32>
      %97 = tpu.concatenate %95, %96 in 1 : vector<32x17xf32>, vector<32x239xf32> -> vector<32x256xf32>
      %cst_39 = arith.constant 0.000000e+00 : f32
      %98 = vector.shape_cast %18 : vector<1x256xi1> to vector<1x256xi1>
      %99 = vector.broadcast %98 : vector<1x256xi1> to vector<32x256xi1>
      %100 = vector.broadcast %cst_39 : f32 to vector<32x256xf32>
      %101 = arith.select %99, %97, %100 : vector<32x256xi1>, vector<32x256xf32>
      %cst_40 = arith.constant 0.000000e+00 : f32
      %102 = vector.broadcast %cst_40 : f32 to vector<32x16xf32>
      %103 = vector.extract_strided_slice %arg8 {offsets = [0, 0], sizes = [32, 240], strides = [1, 1]} : vector<32x256xf32> to vector<32x240xf32>
      %104 = tpu.concatenate %102, %103 in 1 : vector<32x16xf32>, vector<32x240xf32> -> vector<32x256xf32>
      %cst_41 = arith.constant 0.000000e+00 : f32
      %105 = vector.broadcast %cst_41 : f32 to vector<32x15xf32>
      %106 = vector.extract_strided_slice %arg8 {offsets = [0, 0], sizes = [32, 241], strides = [1, 1]} : vector<32x256xf32> to vector<32x241xf32>
      %107 = tpu.concatenate %105, %106 in 1 : vector<32x15xf32>, vector<32x241xf32> -> vector<32x256xf32>
      %cst_42 = arith.constant 0.000000e+00 : f32
      %108 = vector.shape_cast %20 : vector<1x256xi1> to vector<1x256xi1>
      %109 = vector.broadcast %108 : vector<1x256xi1> to vector<32x256xi1>
      %110 = vector.broadcast %cst_42 : f32 to vector<32x256xf32>
      %111 = arith.select %109, %107, %110 : vector<32x256xi1>, vector<32x256xf32>
      %cst_43 = arith.constant 0.000000e+00 : f32
      %112 = vector.broadcast %cst_43 : f32 to vector<32x1xf32>
      %113 = vector.extract_strided_slice %arg8 {offsets = [0, 0], sizes = [32, 255], strides = [1, 1]} : vector<32x256xf32> to vector<32x255xf32>
      %114 = tpu.concatenate %112, %113 in 1 : vector<32x1xf32>, vector<32x255xf32> -> vector<32x256xf32>
      %cst_44 = arith.constant 0.000000e+00 : f32
      %115 = vector.shape_cast %18 : vector<1x256xi1> to vector<1x256xi1>
      %116 = vector.broadcast %115 : vector<1x256xi1> to vector<32x256xi1>
      %117 = vector.broadcast %cst_44 : f32 to vector<32x256xf32>
      %118 = arith.select %116, %114, %117 : vector<32x256xi1>, vector<32x256xf32>
      %cst_45 = arith.constant 0.000000e+00 : f32
      %119 = vector.broadcast %cst_45 : f32 to vector<32x1xf32>
      %120 = vector.extract_strided_slice %arg8 {offsets = [0, 1], sizes = [32, 255], strides = [1, 1]} : vector<32x256xf32> to vector<32x255xf32>
      %121 = tpu.concatenate %120, %119 in 1 : vector<32x255xf32>, vector<32x1xf32> -> vector<32x256xf32>
      %cst_46 = arith.constant 0.000000e+00 : f32
      %122 = vector.shape_cast %20 : vector<1x256xi1> to vector<1x256xi1>
      %123 = vector.broadcast %122 : vector<1x256xi1> to vector<32x256xi1>
      %124 = vector.broadcast %cst_46 : f32 to vector<32x256xf32>
      %125 = arith.select %123, %121, %124 : vector<32x256xi1>, vector<32x256xf32>
      %cst_47 = arith.constant 0.000000e+00 : f32
      %126 = vector.broadcast %cst_47 : f32 to vector<32x15xf32>
      %127 = vector.extract_strided_slice %arg8 {offsets = [0, 15], sizes = [32, 241], strides = [1, 1]} : vector<32x256xf32> to vector<32x241xf32>
      %128 = tpu.concatenate %127, %126 in 1 : vector<32x241xf32>, vector<32x15xf32> -> vector<32x256xf32>
      %cst_48 = arith.constant 0.000000e+00 : f32
      %129 = vector.shape_cast %18 : vector<1x256xi1> to vector<1x256xi1>
      %130 = vector.broadcast %129 : vector<1x256xi1> to vector<32x256xi1>
      %131 = vector.broadcast %cst_48 : f32 to vector<32x256xf32>
      %132 = arith.select %130, %128, %131 : vector<32x256xi1>, vector<32x256xf32>
      %cst_49 = arith.constant 0.000000e+00 : f32
      %133 = vector.broadcast %cst_49 : f32 to vector<32x16xf32>
      %134 = vector.extract_strided_slice %arg8 {offsets = [0, 16], sizes = [32, 240], strides = [1, 1]} : vector<32x256xf32> to vector<32x240xf32>
      %135 = tpu.concatenate %134, %133 in 1 : vector<32x240xf32>, vector<32x16xf32> -> vector<32x256xf32>
      %cst_50 = arith.constant 0.000000e+00 : f32
      %136 = vector.broadcast %cst_50 : f32 to vector<32x17xf32>
      %137 = vector.extract_strided_slice %arg8 {offsets = [0, 17], sizes = [32, 239], strides = [1, 1]} : vector<32x256xf32> to vector<32x239xf32>
      %138 = tpu.concatenate %137, %136 in 1 : vector<32x239xf32>, vector<32x17xf32> -> vector<32x256xf32>
      %cst_51 = arith.constant 0.000000e+00 : f32
      %139 = vector.shape_cast %20 : vector<1x256xi1> to vector<1x256xi1>
      %140 = vector.broadcast %139 : vector<1x256xi1> to vector<32x256xi1>
      %141 = vector.broadcast %cst_51 : f32 to vector<32x256xf32>
      %142 = arith.select %140, %138, %141 : vector<32x256xi1>, vector<32x256xf32>
      %143 = tpu.concatenate %101, %104, %111, %118, %arg8, %125, %132, %135, %142 in 0 : vector<32x256xf32>, vector<32x256xf32>, vector<32x256xf32>, vector<32x256xf32>, vector<32x256xf32>, vector<32x256xf32>, vector<32x256xf32>, vector<32x256xf32>, vector<32x256xf32> -> vector<288x256xf32>
      %cst_52 = arith.constant dense<0.000000e+00> : vector<32x256xf32>
      %144 = tpu.matmul %90, %143, %cst_52 {dimension_numbers = #tpu.dot_dimension_numbers<[1], [0], [0], [1], [0, 0, 1, 1], [], []>} : vector<32x288xf32>, vector<288x256xf32>, vector<32x256xf32> -> vector<32x256xf32>
      %145 = vector.broadcast %94 : vector<32x1xf32> to vector<32x256xf32>
      %146 = arith.addf %144, %145 : vector<32x256xf32>
      %cst_53 = arith.constant 0.000000e+00 : f32
      %147 = vector.broadcast %cst_53 : f32 to vector<32x256xf32>
      %148 = arith.maximumf %146, %147 : vector<32x256xf32>
      %c2_i32_54 = arith.constant 2 : i32
      %149 = arith.muli %c2_i32_54, %arg7 : i32
      %c1_i32_55 = arith.constant 1 : i32
      %150 = arith.addi %149, %c1_i32_55 : i32
      %151 = arith.index_cast %150 : i32 to index
      %c0_56 = arith.constant 0 : index
      %c0_57 = arith.constant 0 : index
      %152 = vector.load %arg4[%151, %c0_56, %c0_57] : memref<4x32x288xf32, #tpu.memory_space<vmem>>, vector<1x32x288xf32>
      %153 = vector.shape_cast %152 : vector<1x32x288xf32> to vector<32x288xf32>
      %c2_i32_58 = arith.constant 2 : i32
      %154 = arith.muli %c2_i32_58, %arg7 : i32
      %c1_i32_59 = arith.constant 1 : i32
      %155 = arith.addi %154, %c1_i32_59 : i32
      %156 = arith.index_cast %155 : i32 to index
      %c0_60 = arith.constant 0 : index
      %c0_61 = arith.constant 0 : index
      %157 = vector.load %arg5[%156, %c0_60, %c0_61] : memref<4x32x1xf32, #tpu.memory_space<vmem>>, vector<1x32x1xf32>
      %158 = vector.shape_cast %157 : vector<1x32x1xf32> to vector<32x1xf32>
      %cst_62 = arith.constant 0.000000e+00 : f32
      %159 = vector.broadcast %cst_62 : f32 to vector<32x17xf32>
      %160 = vector.extract_strided_slice %148 {offsets = [0, 0], sizes = [32, 239], strides = [1, 1]} : vector<32x256xf32> to vector<32x239xf32>
      %161 = tpu.concatenate %159, %160 in 1 : vector<32x17xf32>, vector<32x239xf32> -> vector<32x256xf32>
      %cst_63 = arith.constant 0.000000e+00 : f32
      %162 = vector.shape_cast %18 : vector<1x256xi1> to vector<1x256xi1>
      %163 = vector.broadcast %162 : vector<1x256xi1> to vector<32x256xi1>
      %164 = vector.broadcast %cst_63 : f32 to vector<32x256xf32>
      %165 = arith.select %163, %161, %164 : vector<32x256xi1>, vector<32x256xf32>
      %cst_64 = arith.constant 0.000000e+00 : f32
      %166 = vector.broadcast %cst_64 : f32 to vector<32x16xf32>
      %167 = vector.extract_strided_slice %148 {offsets = [0, 0], sizes = [32, 240], strides = [1, 1]} : vector<32x256xf32> to vector<32x240xf32>
      %168 = tpu.concatenate %166, %167 in 1 : vector<32x16xf32>, vector<32x240xf32> -> vector<32x256xf32>
      %cst_65 = arith.constant 0.000000e+00 : f32
      %169 = vector.broadcast %cst_65 : f32 to vector<32x15xf32>
      %170 = vector.extract_strided_slice %148 {offsets = [0, 0], sizes = [32, 241], strides = [1, 1]} : vector<32x256xf32> to vector<32x241xf32>
      %171 = tpu.concatenate %169, %170 in 1 : vector<32x15xf32>, vector<32x241xf32> -> vector<32x256xf32>
      %cst_66 = arith.constant 0.000000e+00 : f32
      %172 = vector.shape_cast %20 : vector<1x256xi1> to vector<1x256xi1>
      %173 = vector.broadcast %172 : vector<1x256xi1> to vector<32x256xi1>
      %174 = vector.broadcast %cst_66 : f32 to vector<32x256xf32>
      %175 = arith.select %173, %171, %174 : vector<32x256xi1>, vector<32x256xf32>
      %cst_67 = arith.constant 0.000000e+00 : f32
      %176 = vector.broadcast %cst_67 : f32 to vector<32x1xf32>
      %177 = vector.extract_strided_slice %148 {offsets = [0, 0], sizes = [32, 255], strides = [1, 1]} : vector<32x256xf32> to vector<32x255xf32>
      %178 = tpu.concatenate %176, %177 in 1 : vector<32x1xf32>, vector<32x255xf32> -> vector<32x256xf32>
      %cst_68 = arith.constant 0.000000e+00 : f32
      %179 = vector.shape_cast %18 : vector<1x256xi1> to vector<1x256xi1>
      %180 = vector.broadcast %179 : vector<1x256xi1> to vector<32x256xi1>
      %181 = vector.broadcast %cst_68 : f32 to vector<32x256xf32>
      %182 = arith.select %180, %178, %181 : vector<32x256xi1>, vector<32x256xf32>
      %cst_69 = arith.constant 0.000000e+00 : f32
      %183 = vector.broadcast %cst_69 : f32 to vector<32x1xf32>
      %184 = vector.extract_strided_slice %148 {offsets = [0, 1], sizes = [32, 255], strides = [1, 1]} : vector<32x256xf32> to vector<32x255xf32>
      %185 = tpu.concatenate %184, %183 in 1 : vector<32x255xf32>, vector<32x1xf32> -> vector<32x256xf32>
      %cst_70 = arith.constant 0.000000e+00 : f32
      %186 = vector.shape_cast %20 : vector<1x256xi1> to vector<1x256xi1>
      %187 = vector.broadcast %186 : vector<1x256xi1> to vector<32x256xi1>
      %188 = vector.broadcast %cst_70 : f32 to vector<32x256xf32>
      %189 = arith.select %187, %185, %188 : vector<32x256xi1>, vector<32x256xf32>
      %cst_71 = arith.constant 0.000000e+00 : f32
      %190 = vector.broadcast %cst_71 : f32 to vector<32x15xf32>
      %191 = vector.extract_strided_slice %148 {offsets = [0, 15], sizes = [32, 241], strides = [1, 1]} : vector<32x256xf32> to vector<32x241xf32>
      %192 = tpu.concatenate %191, %190 in 1 : vector<32x241xf32>, vector<32x15xf32> -> vector<32x256xf32>
      %cst_72 = arith.constant 0.000000e+00 : f32
      %193 = vector.shape_cast %18 : vector<1x256xi1> to vector<1x256xi1>
      %194 = vector.broadcast %193 : vector<1x256xi1> to vector<32x256xi1>
      %195 = vector.broadcast %cst_72 : f32 to vector<32x256xf32>
      %196 = arith.select %194, %192, %195 : vector<32x256xi1>, vector<32x256xf32>
      %cst_73 = arith.constant 0.000000e+00 : f32
      %197 = vector.broadcast %cst_73 : f32 to vector<32x16xf32>
      %198 = vector.extract_strided_slice %148 {offsets = [0, 16], sizes = [32, 240], strides = [1, 1]} : vector<32x256xf32> to vector<32x240xf32>
      %199 = tpu.concatenate %198, %197 in 1 : vector<32x240xf32>, vector<32x16xf32> -> vector<32x256xf32>
      %cst_74 = arith.constant 0.000000e+00 : f32
      %200 = vector.broadcast %cst_74 : f32 to vector<32x17xf32>
      %201 = vector.extract_strided_slice %148 {offsets = [0, 17], sizes = [32, 239], strides = [1, 1]} : vector<32x256xf32> to vector<32x239xf32>
      %202 = tpu.concatenate %201, %200 in 1 : vector<32x239xf32>, vector<32x17xf32> -> vector<32x256xf32>
      %cst_75 = arith.constant 0.000000e+00 : f32
      %203 = vector.shape_cast %20 : vector<1x256xi1> to vector<1x256xi1>
      %204 = vector.broadcast %203 : vector<1x256xi1> to vector<32x256xi1>
      %205 = vector.broadcast %cst_75 : f32 to vector<32x256xf32>
      %206 = arith.select %204, %202, %205 : vector<32x256xi1>, vector<32x256xf32>
      %207 = tpu.concatenate %165, %168, %175, %182, %148, %189, %196, %199, %206 in 0 : vector<32x256xf32>, vector<32x256xf32>, vector<32x256xf32>, vector<32x256xf32>, vector<32x256xf32>, vector<32x256xf32>, vector<32x256xf32>, vector<32x256xf32>, vector<32x256xf32> -> vector<288x256xf32>
      %cst_76 = arith.constant dense<0.000000e+00> : vector<32x256xf32>
      %208 = tpu.matmul %153, %207, %cst_76 {dimension_numbers = #tpu.dot_dimension_numbers<[1], [0], [0], [1], [0, 0, 1, 1], [], []>} : vector<32x288xf32>, vector<288x256xf32>, vector<32x256xf32> -> vector<32x256xf32>
      %209 = vector.broadcast %158 : vector<32x1xf32> to vector<32x256xf32>
      %210 = arith.addf %208, %209 : vector<32x256xf32>
      %211 = arith.addf %arg8, %210 : vector<32x256xf32>
      scf.yield %211 : vector<32x256xf32>
    }
    %c2_i32_28 = arith.constant 2 : i32
    %c0_29 = arith.constant 0 : index
    %c0_30 = arith.constant 0 : index
    %c0_31 = arith.constant 0 : index
    %84 = vector.load %arg6[%c0_29, %c0_30, %c0_31] : memref<1x32x256xf32, #tpu.memory_space<vmem>>, vector<1x32x256xf32>
    %85 = vector.shape_cast %84 : vector<1x32x256xf32> to vector<32x256xf32>
    %86 = vector.shape_cast %83 : vector<32x256xf32> to vector<1x32x256xf32>
    tpu.vector_store %arg6[%c0_29, %c0_30, %c0_31], %86 {strides = array<i32>} : memref<1x32x256xf32, #tpu.memory_space<vmem>>, vector<1x32x256xf32>,
    return
  }
  func.func @transform_0(%arg0: i32) -> (i32, i32, i32) {
    %c0_i32 = arith.constant 0 : i32
    %c0_i32_0 = arith.constant 0 : i32
    %c0_i32_1 = arith.constant 0 : i32
    return %arg0, %c0_i32, %c0_i32_0 : i32, i32, i32
  }
  func.func @transform_1(%arg0: i32) -> (i32, i32) {
    %c0_i32 = arith.constant 0 : i32
    %c0_i32_0 = arith.constant 0 : i32
    %c0_i32_1 = arith.constant 0 : i32
    return %c0_i32, %c0_i32_0 : i32, i32
  }
  func.func @transform_2(%arg0: i32) -> (i32, i32) {
    %c0_i32 = arith.constant 0 : i32
    %c0_i32_0 = arith.constant 0 : i32
    %c0_i32_1 = arith.constant 0 : i32
    return %c0_i32, %c0_i32_0 : i32, i32
  }
  func.func @transform_3(%arg0: i32) -> (i32, i32, i32) {
    %c0_i32 = arith.constant 0 : i32
    %c0_i32_0 = arith.constant 0 : i32
    %c0_i32_1 = arith.constant 0 : i32
    %c0_i32_2 = arith.constant 0 : i32
    return %c0_i32, %c0_i32_0, %c0_i32_1 : i32, i32, i32
  }
  func.func @transform_4(%arg0: i32) -> (i32, i32, i32) {
    %c0_i32 = arith.constant 0 : i32
    %c0_i32_0 = arith.constant 0 : i32
    %c0_i32_1 = arith.constant 0 : i32
    %c0_i32_2 = arith.constant 0 : i32
    return %c0_i32, %c0_i32_0, %c0_i32_1 : i32, i32, i32
  }
  func.func @transform_5(%arg0: i32) -> (i32, i32, i32) {
    %c0_i32 = arith.constant 0 : i32
    %c0_i32_0 = arith.constant 0 : i32
    %c0_i32_1 = arith.constant 0 : i32
    return %arg0, %c0_i32, %c0_i32_0 : i32, i32, i32
  }
}

</mosaic_0001>

<llo_original>
// kernel: residual_blocks_with_input_conv.1
$region0: #{residual_blocks_with_input_conv.1}
  #allocation0 [shape = 'u32[]', space=smem, size = 0x4, offset = 0x4, fixed_abs, tag = 'smem constant byte address 0x4 - core index']
  #allocation1 [shape = 'u32[144,128]{1,0:T(1,128)}', space=vmem, size = 0x12000, scoped, tag = 'internal scratch']
  %s0 = inlined_call_operand.vmem [shape: f32[2,4,256], index: 0, kind: input, shape index: {}]
  %s1 = inlined_call_operand.vmem [shape: f32[32,36], index: 1, kind: input, shape index: {}]
  %s2 = inlined_call_operand.vmem [shape: f32[32,1], index: 2, kind: input, shape index: {}]
  %s3 = inlined_call_operand.hbm [shape: f32[4,32,288], index: 3, kind: input, shape index: {}]
  %s4 = inlined_call_operand.vmem [shape: f32[4,32,1], index: 4, kind: input, shape index: {}]
  %s5 = inlined_call_operand.vmem [shape: f32[2,32,256], index: 5, kind: output, shape index: {}]
  %s6 = sld [smem:[#allocation0]]
  $region64: #{residual_blocks_with_input_conv.1} parent=0
    _
  %s8 = ssub.s32 1, %s6
  %s9 = scalar_select 0, %s8, %s6
  $region1: #{residual_blocks_with_input_conv.1} parent=0
    #allocation2 [shape = 'u8[196608]{0}', space=vmem, size = 0x30000, scoped, tag = 'input window, operand 3, single buffered']
    #allocation3 [shape = 's32[2]{0}', space=sflag, size = 0x8, scoped, tag = 'scoped memory for residual_blocks_with_input_conv.1']
    %10 = vsyncpa [#allocation3], 0
    loop: start=0, step=1, limit=4
    $region2: #{residual_blocks_with_input_conv.1} parent=1 // loop_pre_header
      _
    $region3: #{residual_blocks_with_input_conv.1} parent=1 // loop_header
      %s12 = sphi 0, %s16
      %p13 = scmp.ge.s32.totalorder %s12, 4
      %s22 = sphi 0, %s24
      %s25 = sphi 0, %s22
      %s26 = sphi 0, %s25
      %s42 = sphi 0, %s26
      %s46 = sphi 0, %s46
      %s48 = sphi 0, %s46
      %s49 = sphi 0, %s48
      %s63 = sphi 0, %s49
      %s67 = sphi 0, %s67
      %s69 = sphi 0, %s67
      %s70 = sphi 0, %s69
      %s84 = sphi 0, %s70
      %s88 = sphi 0, %s88
      %s90 = sphi 0, %s88
      %s91 = sphi 0, %s90
      %s105 = sphi 0, %s91
      %s109 = sphi 0, %s109
      %s111 = sphi 0, %s109
      %s112 = sphi 0, %s111
      %s126 = sphi 0, %s112
      %s132 = sphi 0, %s134
      %s135 = sphi 0, %s132
      %s136 = sphi 0, %s135
      %s152 = sphi 0, %s136
    $region4: #{residual_blocks_with_input_conv.1} parent=1 // loop_header_branch
      %15 = sbr.rel (%p13) target = $region8
    $region5: #{residual_blocks_with_input_conv.1} parent=1 // loop_body
      %s17 = ssub.s32 %s12, 1
      %s18 = ssub.s32 %s12, 2
      %s19 = sadd.s32 %s12, 1
      %s20 = ssub.s32 %s12, %s19
      %p21 = scmp.eq.s32.totalorder %s20, 0
      %s23 = sadd.s32 %s22, 1
      %s24 = scalar_select %p21, %s22, %s23
      %p27 = pneg %p21
      %p28 = scmp.eq.s32.totalorder %s12, 1
      %p29 = por %p27, %p28
      %p30 = scmp.ne.s32.totalorder %s22, %s25
      %p31 = scmp.eq.s32.totalorder %s12, 0
      %p32 = por %p30, %p31
      %p33 = scmp.ne.s32.totalorder %s22, %s25
      %p34 = scmp.eq.s32.totalorder %s17, 1
      %p35 = por %p33, %p34
      %p36 = scmp.ne.s32.totalorder %s25, %s26
      %p37 = scmp.eq.s32.totalorder %s17, 0
      %p38 = por %p36, %p37
      %p39 = scmp.ne.s32.totalorder %s25, %s26
      %p40 = scmp.eq.s32.totalorder %s18, 1
      %p41 = por %p39, %p40
      %p43 = scmp.ne.s32.totalorder %s26, %s42
      %p44 = scmp.eq.s32.totalorder %s18, 0
      %p45 = por %p43, %p44
      %s47 = sadd.s32 %s46, 1
      %p50 = scmp.eq.s32.totalorder %s12, 1
      %p51 = scmp.ne.s32.totalorder %s46, %s48
      %p52 = scmp.eq.s32.totalorder %s12, 0
      %p53 = por %p51, %p52
      %p54 = scmp.ne.s32.totalorder %s46, %s48
      %p55 = scmp.eq.s32.totalorder %s17, 1
      %p56 = por %p54, %p55
      %p57 = scmp.ne.s32.totalorder %s48, %s49
      %p58 = scmp.eq.s32.totalorder %s17, 0
      %p59 = por %p57, %p58
      %p60 = scmp.ne.s32.totalorder %s48, %s49
      %p61 = scmp.eq.s32.totalorder %s18, 1
      %p62 = por %p60, %p61
      %p64 = scmp.ne.s32.totalorder %s49, %s63
      %p65 = scmp.eq.s32.totalorder %s18, 0
      %p66 = por %p64, %p65
      %s68 = sadd.s32 %s67, 1
      %p71 = scmp.eq.s32.totalorder %s12, 1
      %p72 = scmp.ne.s32.totalorder %s67, %s69
      %p73 = scmp.eq.s32.totalorder %s12, 0
      %p74 = por %p72, %p73
      %p75 = scmp.ne.s32.totalorder %s67, %s69
      %p76 = scmp.eq.s32.totalorder %s17, 1
      %p77 = por %p75, %p76
      %p78 = scmp.ne.s32.totalorder %s69, %s70
      %p79 = scmp.eq.s32.totalorder %s17, 0
      %p80 = por %p78, %p79
      %p81 = scmp.ne.s32.totalorder %s69, %s70
      %p82 = scmp.eq.s32.totalorder %s18, 1
      %p83 = por %p81, %p82
      %p85 = scmp.ne.s32.totalorder %s70, %s84
      %p86 = scmp.eq.s32.totalorder %s18, 0
      %p87 = por %p85, %p86
      %s89 = sadd.s32 %s88, 1
      %p92 = scmp.eq.s32.totalorder %s12, 1
      %p93 = scmp.ne.s32.totalorder %s88, %s90
      %p94 = scmp.eq.s32.totalorder %s12, 0
      %p95 = por %p93, %p94
      %p96 = scmp.ne.s32.totalorder %s88, %s90
      %p97 = scmp.eq.s32.totalorder %s17, 1
      %p98 = por %p96, %p97
      %p99 = scmp.ne.s32.totalorder %s90, %s91
      %p100 = scmp.eq.s32.totalorder %s17, 0
      %p101 = por %p99, %p100
      %p102 = scmp.ne.s32.totalorder %s90, %s91
      %p103 = scmp.eq.s32.totalorder %s18, 1
      %p104 = por %p102, %p103
      %p106 = scmp.ne.s32.totalorder %s91, %s105
      %p107 = scmp.eq.s32.totalorder %s18, 0
      %p108 = por %p106, %p107
      %s110 = sadd.s32 %s109, 1
      %p113 = scmp.eq.s32.totalorder %s12, 1
      %p114 = scmp.ne.s32.totalorder %s109, %s111
      %p115 = scmp.eq.s32.totalorder %s12, 0
      %p116 = por %p114, %p115
      %p117 = scmp.ne.s32.totalorder %s109, %s111
      %p118 = scmp.eq.s32.totalorder %s17, 1
      %p119 = por %p117, %p118
      %p120 = scmp.ne.s32.totalorder %s111, %s112
      %p121 = scmp.eq.s32.totalorder %s17, 0
      %p122 = por %p120, %p121
      %p123 = scmp.ne.s32.totalorder %s111, %s112
      %p124 = scmp.eq.s32.totalorder %s18, 1
      %p125 = por %p123, %p124
      %p127 = scmp.ne.s32.totalorder %s112, %s126
      %p128 = scmp.eq.s32.totalorder %s18, 0
      %p129 = por %p127, %p128
      %s130 = ssub.s32 %s12, %s19
      %p131 = scmp.eq.s32.totalorder %s130, 0
      %s133 = sadd.s32 %s132, 1
      %s134 = scalar_select %p131, %s132, %s133
      %p137 = pneg %p131
      %p138 = scmp.eq.s32.totalorder %s12, 1
      %p139 = por %p137, %p138
      %p140 = scmp.ne.s32.totalorder %s132, %s135
      %p141 = scmp.eq.s32.totalorder %s12, 0
      %p142 = por %p140, %p141
      %p143 = scmp.ne.s32.totalorder %s132, %s135
      %p144 = scmp.eq.s32.totalorder %s17, 1
      %p145 = por %p143, %p144
      %p146 = scmp.ne.s32.totalorder %s135, %s136
      %p147 = scmp.eq.s32.totalorder %s17, 0
      %p148 = por %p146, %p147
      %p149 = scmp.ne.s32.totalorder %s135, %s136
      %p150 = scmp.eq.s32.totalorder %s18, 1
      %p151 = por %p149, %p150
      %p153 = scmp.ne.s32.totalorder %s136, %s152
      %p154 = scmp.eq.s32.totalorder %s18, 0
      %p155 = por %p153, %p154
      %p156 = scmp.le.s32.totalorder 1, %s12
      %p157 = scmp.lt.s32.totalorder %s12, 3
      %p158 = pnand %p156, %p157
      %p159 = pneg %p158
      // Predicated region
      $region9: #{residual_blocks_with_input_conv.1} parent=5 // pred_check
        _
      $region10: #{residual_blocks_with_input_conv.1} parent=5 // pred_check_branch
        %161 = sbr.rel (%p158) target = $region12
      $region11: #{residual_blocks_with_input_conv.1} parent=5 // pred_region
        %s162 = ssub.s32 %s12, 1
        // Predicated region
        $region13: #{residual_blocks_with_input_conv.1} parent=11 // pred_check
          %p163 = pneg %p59
        $region14: #{residual_blocks_with_input_conv.1} parent=11 // pred_check_branch
          %165 = sbr.rel (%p163) target = $region16
        $region15: #{residual_blocks_with_input_conv.1} parent=11 // pred_region
          _
        $region16: #{residual_blocks_with_input_conv.1} parent=11 // pred_fallthru
          _
        // Predicated region
        $region17: #{residual_blocks_with_input_conv.1} parent=11 // pred_check
          %p166 = pneg %p80
        $region18: #{residual_blocks_with_input_conv.1} parent=11 // pred_check_branch
          %168 = sbr.rel (%p166) target = $region20
        $region19: #{residual_blocks_with_input_conv.1} parent=11 // pred_region
          _
        $region20: #{residual_blocks_with_input_conv.1} parent=11 // pred_fallthru
          _
        // Predicated region
        $region21: #{residual_blocks_with_input_conv.1} parent=11 // pred_check
          %p169 = pneg %p101
        $region22: #{residual_blocks_with_input_conv.1} parent=11 // pred_check_branch
          %171 = sbr.rel (%p169) target = $region24
        $region23: #{residual_blocks_with_input_conv.1} parent=11 // pred_region
          %s173 = ssub.s32 6144, 6144
          %174 = vsyncadd [#allocation3], %s173
          %s175 = sshll.u32 [#allocation2], 4
          %s176 = int_to_ptr.vmem [resolvable:$true] %s175
          %181 = dma.hbm_to_vmem [thread:$0]  %s3, 6144, %s176, [#allocation3], 384, 384, 24
        $region24: #{residual_blocks_with_input_conv.1} parent=11 // pred_fallthru
          _
        // Predicated region
        $region25: #{residual_blocks_with_input_conv.1} parent=11 // pred_check
          %p182 = pneg %p122
        $region26: #{residual_blocks_with_input_conv.1} parent=11 // pred_check_branch
          %184 = sbr.rel (%p182) target = $region28
        $region27: #{residual_blocks_with_input_conv.1} parent=11 // pred_region
          _
        $region28: #{residual_blocks_with_input_conv.1} parent=11 // pred_fallthru
          _
      $region12: #{residual_blocks_with_input_conv.1} parent=5 // pred_fallthru
        _
      %p185 = scmp.lt.s32.totalorder %s12, 2
      // Predicated region
      $region29: #{residual_blocks_with_input_conv.1} parent=5 // pred_check
        %p186 = pneg %p185
      $region30: #{residual_blocks_with_input_conv.1} parent=5 // pred_check_branch
        %188 = sbr.rel (%p186) target = $region32
      $region31: #{residual_blocks_with_input_conv.1} parent=5 // pred_region
        // Predicated region
        $region33: #{residual_blocks_with_input_conv.1} parent=31 // pred_check
          %p189 = pneg %p32
        $region34: #{residual_blocks_with_input_conv.1} parent=31 // pred_check_branch
          %191 = sbr.rel (%p189) target = $region36
        $region35: #{residual_blocks_with_input_conv.1} parent=31 // pred_region
          %p192 = scmp.lt.s32.totalorder %s12, 1
          %s193 = scalar_select %p192, %s12, 1
          %s194 = smul.addr %s193, 2
          %s195 = smul.addr %s194, 4
          %s196 = scalar_lea.vmem %s0, %s195
        $region36: #{residual_blocks_with_input_conv.1} parent=31 // pred_fallthru
          _
      $region32: #{residual_blocks_with_input_conv.1} parent=5 // pred_fallthru
        _
      %p197 = scmp.le.s32.totalorder 1, %s12
      %p198 = scmp.lt.s32.totalorder %s12, 3
      %p199 = pnand %p197, %p198
      %p200 = pneg %p199
      // Predicated region
      $region37: #{residual_blocks_with_input_conv.1} parent=5 // pred_check
        _
      $region38: #{residual_blocks_with_input_conv.1} parent=5 // pred_check_branch
        %202 = sbr.rel (%p199) target = $region40
      $region39: #{residual_blocks_with_input_conv.1} parent=5 // pred_region
        %s203 = ssub.s32 %s12, 1
        // Predicated region
        $region41: #{residual_blocks_with_input_conv.1} parent=39 // pred_check
          %p204 = pneg %p101
        $region42: #{residual_blocks_with_input_conv.1} parent=39 // pred_check_branch
          %206 = sbr.rel (%p204) target = $region44
        $region43: #{residual_blocks_with_input_conv.1} parent=39 // pred_region
          %207 = dma.done [#allocation3], 6144
        $region44: #{residual_blocks_with_input_conv.1} parent=39 // pred_fallthru
          _
        %p208 = scmp.lt.s32.totalorder %s17, 1
        %s209 = scalar_select %p208, %s17, 1
        %s210 = smul.addr %s209, 2
        %s211 = smul.addr %s210, 4
        %s212 = scalar_lea.vmem %s0, %s211
        %p213 = pneg %p38
        %p214 = pneg %p35
        %p215 = pneg %p59
        %p216 = pneg %p56
        %p217 = pneg %p80
        %p218 = pneg %p77
        %p219 = pneg %p101
        %p220 = pneg %p98
        %p221 = pneg %p122
        %p222 = pneg %p119
        %p223 = pneg %p148
        %p224 = pneg %p145
        %p225 = scmp.lt.s32.totalorder %s17, 1
        %s226 = scalar_select %p225, %s17, 1
        %s227 = smul.addr %s226, 8
        %s228 = smul.addr %s227, 8
        %s229 = scalar_lea.vmem %s5, %s228
        %p230 = scmp.lt.s32.totalorder %s17, 1
        %s231 = scalar_select %p230, %s17, 1
        %s232 = smul.addr %s231, 2
        %s233 = smul.addr %s232, 4
        %s234 = scalar_lea.vmem %s0, %s233
        %p235 = scmp.lt.s32.totalorder %s17, 1
        %s236 = scalar_select %p235, %s17, 1
        %s237 = smul.addr %s236, 8
        %s238 = smul.addr %s237, 8
        %s239 = scalar_lea.vmem %s5, %s238
        %v240 = vlaneseq
        %v241 = vand.u32 %v240, 127
        %v242 = vadd.s32 %v241, 128
        %vm243 = vcmp.lt.s32.totalorder %v241, 0
        %v244 = vsub.s32 0, %v241
        %v245 = vsel %vm243, %v244, %v241
        %v246 = vshrl.u32 %v245, 4
        %v247 = vand.u32 %v245, 15
        %v248 = vsub.s32 0, %v247
        %v249 = vsel %vm243, %v248, %v247
        %vm250 = vcmp.lt.s32.totalorder %v242, 0
        %v251 = vsub.s32 0, %v242
        %v252 = vsel %vm250, %v251, %v242
        %v253 = vshrl.u32 %v252, 4
        %v254 = vand.u32 %v252, 15
        %v255 = vsub.s32 0, %v254
        %v256 = vsel %vm250, %v255, %v254
        %vm257 = vcmp.ne.s32.totalorder %v249, 0
        %vm258 = vcmp.ne.s32.totalorder %v256, 0
        %vm259 = vcmp.lt.s32.totalorder %v249, 0
        %vm260 = vcmp.lt.s32.totalorder %v256, 0
        %vm261 = vmand %vm259, %vm257
        %vm262 = vmand %vm260, %vm258
        %v263 = vadd.s32 %v249, 16
        %v264 = vadd.s32 %v256, 16
        %v265 = vsel %vm261, %v263, %v249
        %v266 = vsel %vm262, %v264, %v256
        %vm267 = vcmp.gt.s32.totalorder %v265, 0
        %vm268 = vcmp.gt.s32.totalorder %v266, 0
        %vm269 = vcmp.lt.s32.totalorder %v265, 15
        %vm270 = vcmp.lt.s32.totalorder %v266, 15
        %v271 = vld [vmem:[%s234] sm:$0xff]
        %v272 = vld [vmem:[%s1] sm:$0xff]
        %v273 = vld [vmem:[%s1 + $0x8] sm:$0xff]
        %v274 = vld [vmem:[%s1 + $0x10] sm:$0xff]
        %v275 = vld [vmem:[%s1 + $0x18] sm:$0xff]
        %v276 = vld [vmem:[%s2] sm:$0xff]
        %v277 = vld [vmem:[%s2 + $0x8] sm:$0xff]
        %v278 = vld [vmem:[%s2 + $0x10] sm:$0xff]
        %v279 = vld [vmem:[%s2 + $0x18] sm:$0xff]
        %v281 = vcombine.high %v271, %v271
        %282 = vrot.lane.b32.xlu0 %v271, 17
        %v283 = vpop.permute.xlu0 %282
        %284 = vrot.lane.b32.xlu0 %v281, 17
        %v285 = vpop.permute.xlu0 %284
        %vm286 = vcmask 138240
        %v287 = vsel %vm286, %v283, %v285
        %v290 = vsel %vm286, 0.0, %v283
        %v291 = vsel %vm267, 1, 0
        %v292 = vsel %vm268, 1, 0
        %vm293 = vcmp.eq.s32.totalorder %v291, 1
        %vm294 = vcmp.eq.s32.totalorder %v292, 1
        %v295 = vsel %vm293, %v290, 0.0
        %v296 = vsel %vm294, %v287, 0.0
        %297 = vrot.lane.b32.xlu0 %v271, 16
        %v298 = vpop.permute.xlu0 %297
        %299 = vrot.lane.b32.xlu0 %v281, 16
        %v300 = vpop.permute.xlu0 %299
        %vm301 = vcmask 130048
        %v302 = vsel %vm301, %v298, %v300
        %v304 = vsel %vm301, 0.0, %v298
        %305 = vrot.lane.b32.xlu0 %v271, 15
        %v306 = vpop.permute.xlu0 %305
        %307 = vrot.lane.b32.xlu0 %v281, 15
        %v308 = vpop.permute.xlu0 %307
        %vm309 = vcmask 121856
        %v310 = vsel %vm309, %v306, %v308
        %v313 = vsel %vm309, 0.0, %v306
        %v314 = vsel %vm269, 1, 0
        %v315 = vsel %vm270, 1, 0
        %vm316 = vcmp.eq.s32.totalorder %v314, 1
        %vm317 = vcmp.eq.s32.totalorder %v315, 1
        %v318 = vsel %vm316, %v313, 0.0
        %v319 = vsel %vm317, %v310, 0.0
        %320 = vrot.lane.b32.xlu0 %v271, 1
        %v321 = vpop.permute.xlu0 %320
        %322 = vrot.lane.b32.xlu0 %v281, 1
        %v323 = vpop.permute.xlu0 %322
        %vm324 = vcmask 7168
        %v325 = vsel %vm324, %v321, %v323
        %v328 = vsel %vm324, 0.0, %v321
        %v329 = vsel %vm293, %v328, 0.0
        %v330 = vsel %vm294, %v325, 0.0
        %331 = vrot.lane.b32.xlu0 %v271, 127
        %v332 = vpop.permute.xlu0 %331
        %333 = vrot.lane.b32.xlu0 %v281, 127
        %v334 = vpop.permute.xlu0 %333
        %vm335 = vcmask 1039360
        %v336 = vsel %vm335, %v332, %v334
        %v339 = vsel %vm335, %v334, 0.0
        %v340 = vsel %vm316, %v336, 0.0
        %v341 = vsel %vm317, %v339, 0.0
        %342 = vrot.lane.b32.xlu0 %v271, 113
        %v343 = vpop.permute.xlu0 %342
        %344 = vrot.lane.b32.xlu0 %v281, 113
        %v345 = vpop.permute.xlu0 %344
        %vm346 = vcmask 924672
        %v347 = vsel %vm346, %v343, %v345
        %v350 = vsel %vm346, %v345, 0.0
        %v351 = vsel %vm293, %v347, 0.0
        %v352 = vsel %vm294, %v350, 0.0
        %353 = vrot.lane.b32.xlu0 %v271, 112
        %v354 = vpop.permute.xlu0 %353
        %355 = vrot.lane.b32.xlu0 %v281, 112
        %v356 = vpop.permute.xlu0 %355
        %vm357 = vcmask 916480
        %v358 = vsel %vm357, %v354, %v356
        %v360 = vsel %vm357, %v356, 0.0
        %361 = vrot.lane.b32.xlu0 %v271, 111
        %v362 = vpop.permute.xlu0 %361
        %363 = vrot.lane.b32.xlu0 %v281, 111
        %v364 = vpop.permute.xlu0 %363
        %vm365 = vcmask 908288
        %v366 = vsel %vm365, %v362, %v364
        %v369 = vsel %vm365, %v364, 0.0
        %v370 = vsel %vm316, %v366, 0.0
        %v371 = vsel %vm317, %v369, 0.0
        %v373 = vrot.slane %v304, 4
        %v374 = vrot.slane %v302, 4
        %v379 = vrot.slane %v329, 4
        %v380 = vrot.slane %v330, 4
        %v386 = vrot.slane %v340, 4
        %v387 = vrot.slane %v341, 4
        %v391 = vrot.slane %v358, 4
        %v392 = vrot.slane %v360, 4
        %vm395 = vcmask 1043456
        %v396 = vsel %vm395, %v295, %v373
        %v397 = vsel %vm395, %v296, %v374
        %v398 = vsel %vm395, %v318, %v379
        %v399 = vsel %vm395, %v319, %v380
        %v400 = vsel %vm395, %v271, %v386
        %v401 = vsel %vm395, %v281, %v387
        %v402 = vsel %vm395, %v351, %v391
        %v403 = vsel %vm395, %v352, %v392
        %405 = vset.pattern.permute.xlu0 0
        %406 = vperm.xlu0 %405, %v276
        %v407 = vpop.permute.xlu0 %406
        %410 = vset.pattern.permute.xlu0 0
        %411 = vperm.xlu0 %410, %v277
        %v412 = vpop.permute.xlu0 %411
        %415 = vset.pattern.permute.xlu0 0
        %416 = vperm.xlu0 %415, %v278
        %v417 = vpop.permute.xlu0 %416
        %420 = vset.pattern.permute.xlu0 0
        %421 = vperm.xlu0 %420, %v279
        %v422 = vpop.permute.xlu0 %421
        %vm424 = vcmask 293888
        %v426 = vsel %vm424, %v272, 0
        %v429 = vsel %vm424, %v273, 0
        %v432 = vsel %vm424, %v274, 0
        %v435 = vsel %vm424, %v275, 0
        %v438 = vsel %vm395, %v370, 0
        %v441 = vsel %vm395, %v371, 0
        %443 = vmatprep.subr.mxu0 0.0
        %444 = vmatpush1.msra.mxu0 0.0
        %445 = vmatprep.subr.mxu0 0.0
        %446 = vmatpush1.msra.mxu0 0.0
        %447 = vmatprep.subr.mxu0 0.0
        %448 = vmatpush1.msra.mxu0 0.0
        %449 = vmatprep.subr.mxu0 0.0
        %450 = vmatpush1.msra.mxu0 0.0
        %451 = vmatprep.subr.mxu0 0.0
        %452 = vmatpush1.msra.mxu0 0.0
        %453 = vmatprep.subr.mxu0 0.0
        %454 = vmatpush1.msra.mxu0 0.0
        %455 = vmatprep.subr.mxu0 0.0
        %456 = vmatpush1.msra.mxu0 0.0
        %457 = vmatprep.subr.mxu0 0.0
        %458 = vmatpush1.msra.mxu0 0.0
        %459 = vmatprep.subr.mxu0 0.0
        %460 = vmatpush1.msra.mxu0 0.0
        %461 = vmatprep.subr.mxu0 0.0
        %462 = vmatpush1.msra.mxu0 0.0
        %463 = vmatprep.subr.mxu0 0.0
        %464 = vmatpush1.msra.mxu0 0.0
        %465 = vmatprep.subr.mxu0 %v441
        %466 = vmatpush1.msra.mxu0 %v438
        %467 = vmatprep.subr.mxu0 %v403
        %468 = vmatpush1.msra.mxu0 %v402
        %469 = vmatprep.subr.mxu0 %v401
        %470 = vmatpush1.msra.mxu0 %v400
        %471 = vmatprep.subr.mxu0 %v399
        %472 = vmatpush1.msra.mxu0 %v398
        %473 = vmatprep.subr.mxu0 %v397
        %474 = vmatpush1.msra.mxu0 %v396
        %475 = vmatprep.subr.mxu0 0.0
        %476 = vmatpush2.msra.mxu0 0.0
        %477 = vmatprep.subr.mxu0 0.0
        %478 = vmatpush2.msra.mxu0 0.0
        %479 = vmatprep.subr.mxu0 0.0
        %480 = vmatpush2.msra.mxu0 0.0
        %481 = vmatprep.subr.mxu0 0.0
        %482 = vmatpush2.msra.mxu0 0.0
        %483 = vmatprep.subr.mxu0 0.0
        %484 = vmatpush2.msra.mxu0 0.0
        %485 = vmatprep.subr.mxu0 0.0
        %486 = vmatpush2.msra.mxu0 0.0
        %487 = vmatprep.subr.mxu0 0.0
        %488 = vmatpush2.msra.mxu0 0.0
        %489 = vmatprep.subr.mxu0 0.0
        %490 = vmatpush2.msra.mxu0 0.0
        %491 = vmatprep.subr.mxu0 0.0
        %492 = vmatpush2.msra.mxu0 0.0
        %493 = vmatprep.subr.mxu0 0.0
        %494 = vmatpush2.msra.mxu0 0.0
        %495 = vmatprep.subr.mxu0 0.0
        %496 = vmatpush2.msra.mxu0 0.0
        %497 = vmatprep.subr.mxu0 0.0
        %498 = vmatpush2.msra.mxu0 0.0
        %499 = vmatprep.subr.mxu0 0.0
        %500 = vmatpush2.msra.mxu0 0.0
        %501 = vmatprep.subr.mxu0 0.0
        %502 = vmatpush2.msra.mxu0 0.0
        %503 = vmatprep.subr.mxu0 0.0
        %504 = vmatpush2.msra.mxu0 0.0
        %505 = vmatprep.subr.mxu0 0.0
        %506 = vmatpush2.msra.mxu0 0.0
        %507 = vmatprep.mubr.f32.mxu0 0.0
        %508 = vmatmul.mubr.f32.gmra.mxu0 %v426
        %v509 = vpop.f32.mrf.mxu0
        %v510 = vadd.f32 %v407, %v509
        %v511 = vpop.f32.mrf.mxu0
        %v512 = vadd.f32 %v407, %v511
        %513 = vmatprep.mubr.f32.mxu0 0.0
        %514 = vmatmul.mubr.f32.gmra.mxu0 %v429
        %v515 = vpop.f32.mrf.mxu0
        %v516 = vadd.f32 %v412, %v515
        %v517 = vpop.f32.mrf.mxu0
        %v518 = vadd.f32 %v412, %v517
        %519 = vmatprep.mubr.f32.mxu0 0.0
        %520 = vmatmul.mubr.f32.gmra.mxu0 %v432
        %v521 = vpop.f32.mrf.mxu0
        %v522 = vadd.f32 %v417, %v521
        %v523 = vpop.f32.mrf.mxu0
        %v524 = vadd.f32 %v417, %v523
        %525 = vmatprep.mubr.f32.mxu0 0.0
        %526 = vmatmul.mubr.f32.gmra.mxu0 %v435
        %v527 = vpop.f32.mrf.mxu0
        %v528 = vadd.f32 %v422, %v527
        %v529 = vpop.f32.mrf.mxu0
        %v530 = vadd.f32 %v422, %v529
        %531 = vdwg.mxu0
        %vm532 = vcmp.ge.f32.partialorder %v510, 0.0
        %vm533 = vcmp.ge.f32.partialorder %v512, 0.0
        %vm534 = vcmp.ge.f32.partialorder %v516, 0.0
        %vm535 = vcmp.ge.f32.partialorder %v518, 0.0
        %vm536 = vcmp.ge.f32.partialorder %v522, 0.0
        %vm537 = vcmp.ge.f32.partialorder %v524, 0.0
        %vm538 = vcmp.ge.f32.partialorder %v528, 0.0
        %vm539 = vcmp.ge.f32.partialorder %v530, 0.0
        %v540 = vmul.f32 %v510, 0.1
        %v541 = vmul.f32 %v512, 0.1
        %v542 = vmul.f32 %v516, 0.1
        %v543 = vmul.f32 %v518, 0.1
        %v544 = vmul.f32 %v522, 0.1
        %v545 = vmul.f32 %v524, 0.1
        %v546 = vmul.f32 %v528, 0.1
        %v547 = vmul.f32 %v530, 0.1
        %v548 = vsel %vm532, %v510, %v540
        %v549 = vsel %vm533, %v512, %v541
        %v550 = vsel %vm534, %v516, %v542
        %v551 = vsel %vm535, %v518, %v543
        %v552 = vsel %vm536, %v522, %v544
        %v553 = vsel %vm537, %v524, %v545
        %v554 = vsel %vm538, %v528, %v546
        %v555 = vsel %vm539, %v530, %v547
        loop: start=0, step=1, limit=2
        $region45: #{residual_blocks_with_input_conv.1} parent=39 // loop_pre_header
          _
        $region46: #{residual_blocks_with_input_conv.1} parent=39 // loop_header
          %s557 = sphi 0, %s561
          %p558 = scmp.ge.s32.totalorder %s557, 2
          %v562 = vphi %v548, %v1667
          %v563 = vphi %v549, %v1668
          %v564 = vphi %v550, %v1669
          %v565 = vphi %v551, %v1670
          %v566 = vphi %v552, %v1671
          %v567 = vphi %v553, %v1672
          %v568 = vphi %v554, %v1673
          %v569 = vphi %v555, %v1674
        $region47: #{residual_blocks_with_input_conv.1} parent=39 // loop_header_branch
          %560 = sbr.rel (%p558) target = $region51
        $region48: #{residual_blocks_with_input_conv.1} parent=39 // loop_body
          %s570 = smul.u32 %s557, 2
          %s571 = smul.u32 %s570, 12
          %s572 = smul.addr %s571, 8
          %s573 = scalar_lea.vmem [#allocation2], %s572
          %v574 = vld [vmem:[%s573] sm:$0xff]
          %v575 = vld [vmem:[%s573 + $0x8] sm:$0xff]
          %v576 = vld [vmem:[%s573 + $0x10] sm:$0xff]
          %v577 = vld [vmem:[%s573 + $0x18] sm:$0xff]
          %v578 = vld [vmem:[%s573 + $0x20] sm:$0xff]
          %v579 = vld [vmem:[%s573 + $0x28] sm:$0xff]
          %v580 = vld [vmem:[%s573 + $0x30] sm:$0xff]
          %v581 = vld [vmem:[%s573 + $0x38] sm:$0xff]
          %v582 = vld [vmem:[%s573 + $0x40] sm:$0xff]
          %v583 = vld [vmem:[%s573 + $0x48] sm:$0xff]
          %v584 = vld [vmem:[%s573 + $0x50] sm:$0xff]
          %v585 = vld [vmem:[%s573 + $0x58] sm:$0xff]
          %s586 = smul.u32 %s570, 32
          %s587 = scalar_lea.vmem %s4, %s586
          %v588 = vld [vmem:[%s587] sm:$0xff]
          %v589 = vld [vmem:[%s587 + $0x8] sm:$0xff]
          %v590 = vld [vmem:[%s587 + $0x10] sm:$0xff]
          %v591 = vld [vmem:[%s587 + $0x18] sm:$0xff]
          %600 = vrot.lane.b32.xlu0 %v562, 17
          %v601 = vpop.permute.xlu0 %600
          %602 = vrot.lane.b32.xlu0 %v563, 17
          %v603 = vpop.permute.xlu0 %602
          %604 = vrot.lane.b32.xlu0 %v564, 17
          %v605 = vpop.permute.xlu0 %604
          %606 = vrot.lane.b32.xlu0 %v565, 17
          %v607 = vpop.permute.xlu0 %606
          %608 = vrot.lane.b32.xlu0 %v566, 17
          %v609 = vpop.permute.xlu0 %608
          %610 = vrot.lane.b32.xlu0 %v567, 17
          %v611 = vpop.permute.xlu0 %610
          %612 = vrot.lane.b32.xlu0 %v568, 17
          %v613 = vpop.permute.xlu0 %612
          %614 = vrot.lane.b32.xlu0 %v569, 17
          %v615 = vpop.permute.xlu0 %614
          %v616 = vsel %vm286, %v601, %v603
          %v617 = vsel %vm286, %v605, %v607
          %v618 = vsel %vm286, %v609, %v611
          %v619 = vsel %vm286, %v613, %v615
          %v628 = vsel %vm286, 0.0, %v601
          %v629 = vsel %vm286, 0.0, %v605
          %v630 = vsel %vm286, 0.0, %v609
          %v631 = vsel %vm286, 0.0, %v613
          %v632 = vsel %vm293, %v628, 0.0
          %v633 = vsel %vm294, %v616, 0.0
          %v634 = vsel %vm293, %v629, 0.0
          %v635 = vsel %vm294, %v617, 0.0
          %v636 = vsel %vm293, %v630, 0.0
          %v637 = vsel %vm294, %v618, 0.0
          %v638 = vsel %vm293, %v631, 0.0
          %v639 = vsel %vm294, %v619, 0.0
          %640 = vrot.lane.b32.xlu0 %v562, 16
          %v641 = vpop.permute.xlu0 %640
          %642 = vrot.lane.b32.xlu0 %v563, 16
          %v643 = vpop.permute.xlu0 %642
          %644 = vrot.lane.b32.xlu0 %v564, 16
          %v645 = vpop.permute.xlu0 %644
          %646 = vrot.lane.b32.xlu0 %v565, 16
          %v647 = vpop.permute.xlu0 %646
          %648 = vrot.lane.b32.xlu0 %v566, 16
          %v649 = vpop.permute.xlu0 %648
          %650 = vrot.lane.b32.xlu0 %v567, 16
          %v651 = vpop.permute.xlu0 %650
          %652 = vrot.lane.b32.xlu0 %v568, 16
          %v653 = vpop.permute.xlu0 %652
          %654 = vrot.lane.b32.xlu0 %v569, 16
          %v655 = vpop.permute.xlu0 %654
          %v656 = vsel %vm301, %v641, %v643
          %v657 = vsel %vm301, %v645, %v647
          %v658 = vsel %vm301, %v649, %v651
          %v659 = vsel %vm301, %v653, %v655
          %v668 = vsel %vm301, 0.0, %v641
          %v669 = vsel %vm301, 0.0, %v645
          %v670 = vsel %vm301, 0.0, %v649
          %v671 = vsel %vm301, 0.0, %v653
          %672 = vrot.lane.b32.xlu0 %v562, 15
          %v673 = vpop.permute.xlu0 %672
          %674 = vrot.lane.b32.xlu0 %v563, 15
          %v675 = vpop.permute.xlu0 %674
          %676 = vrot.lane.b32.xlu0 %v564, 15
          %v677 = vpop.permute.xlu0 %676
          %678 = vrot.lane.b32.xlu0 %v565, 15
          %v679 = vpop.permute.xlu0 %678
          %680 = vrot.lane.b32.xlu0 %v566, 15
          %v681 = vpop.permute.xlu0 %680
          %682 = vrot.lane.b32.xlu0 %v567, 15
          %v683 = vpop.permute.xlu0 %682
          %684 = vrot.lane.b32.xlu0 %v568, 15
          %v685 = vpop.permute.xlu0 %684
          %686 = vrot.lane.b32.xlu0 %v569, 15
          %v687 = vpop.permute.xlu0 %686
          %v688 = vsel %vm309, %v673, %v675
          %v689 = vsel %vm309, %v677, %v679
          %v690 = vsel %vm309, %v681, %v683
          %v691 = vsel %vm309, %v685, %v687
          %v700 = vsel %vm309, 0.0, %v673
          %v701 = vsel %vm309, 0.0, %v677
          %v702 = vsel %vm309, 0.0, %v681
          %v703 = vsel %vm309, 0.0, %v685
          %v704 = vsel %vm316, %v700, 0.0
          %v705 = vsel %vm317, %v688, 0.0
          %v706 = vsel %vm316, %v701, 0.0
          %v707 = vsel %vm317, %v689, 0.0
          %v708 = vsel %vm316, %v702, 0.0
          %v709 = vsel %vm317, %v690, 0.0
          %v710 = vsel %vm316, %v703, 0.0
          %v711 = vsel %vm317, %v691, 0.0
          %712 = vrot.lane.b32.xlu0 %v562, 1
          %v713 = vpop.permute.xlu0 %712
          %714 = vrot.lane.b32.xlu0 %v563, 1
          %v715 = vpop.permute.xlu0 %714
          %716 = vrot.lane.b32.xlu0 %v564, 1
          %v717 = vpop.permute.xlu0 %716
          %718 = vrot.lane.b32.xlu0 %v565, 1
          %v719 = vpop.permute.xlu0 %718
          %720 = vrot.lane.b32.xlu0 %v566, 1
          %v721 = vpop.permute.xlu0 %720
          %722 = vrot.lane.b32.xlu0 %v567, 1
          %v723 = vpop.permute.xlu0 %722
          %724 = vrot.lane.b32.xlu0 %v568, 1
          %v725 = vpop.permute.xlu0 %724
          %726 = vrot.lane.b32.xlu0 %v569, 1
          %v727 = vpop.permute.xlu0 %726
          %v728 = vsel %vm324, %v713, %v715
          %v729 = vsel %vm324, %v717, %v719
          %v730 = vsel %vm324, %v721, %v723
          %v731 = vsel %vm324, %v725, %v727
          %v740 = vsel %vm324, 0.0, %v713
          %v741 = vsel %vm324, 0.0, %v717
          %v742 = vsel %vm324, 0.0, %v721
          %v743 = vsel %vm324, 0.0, %v725
          %v744 = vsel %vm293, %v740, 0.0
          %v745 = vsel %vm294, %v728, 0.0
          %v746 = vsel %vm293, %v741, 0.0
          %v747 = vsel %vm294, %v729, 0.0
          %v748 = vsel %vm293, %v742, 0.0
          %v749 = vsel %vm294, %v730, 0.0
          %v750 = vsel %vm293, %v743, 0.0
          %v751 = vsel %vm294, %v731, 0.0
          %752 = vrot.lane.b32.xlu0 %v562, 127
          %v753 = vpop.permute.xlu0 %752
          %754 = vrot.lane.b32.xlu0 %v563, 127
          %v755 = vpop.permute.xlu0 %754
          %756 = vrot.lane.b32.xlu0 %v564, 127
          %v757 = vpop.permute.xlu0 %756
          %758 = vrot.lane.b32.xlu0 %v565, 127
          %v759 = vpop.permute.xlu0 %758
          %760 = vrot.lane.b32.xlu0 %v566, 127
          %v761 = vpop.permute.xlu0 %760
          %762 = vrot.lane.b32.xlu0 %v567, 127
          %v763 = vpop.permute.xlu0 %762
          %764 = vrot.lane.b32.xlu0 %v568, 127
          %v765 = vpop.permute.xlu0 %764
          %766 = vrot.lane.b32.xlu0 %v569, 127
          %v767 = vpop.permute.xlu0 %766
          %v768 = vsel %vm335, %v753, %v755
          %v769 = vsel %vm335, %v757, %v759
          %v770 = vsel %vm335, %v761, %v763
          %v771 = vsel %vm335, %v765, %v767
          %v780 = vsel %vm335, %v755, 0.0
          %v781 = vsel %vm335, %v759, 0.0
          %v782 = vsel %vm335, %v763, 0.0
          %v783 = vsel %vm335, %v767, 0.0
          %v784 = vsel %vm316, %v768, 0.0
          %v785 = vsel %vm317, %v780, 0.0
          %v786 = vsel %vm316, %v769, 0.0
          %v787 = vsel %vm317, %v781, 0.0
          %v788 = vsel %vm316, %v770, 0.0
          %v789 = vsel %vm317, %v782, 0.0
          %v790 = vsel %vm316, %v771, 0.0
          %v791 = vsel %vm317, %v783, 0.0
          %792 = vrot.lane.b32.xlu0 %v562, 113
          %v793 = vpop.permute.xlu0 %792
          %794 = vrot.lane.b32.xlu0 %v563, 113
          %v795 = vpop.permute.xlu0 %794
          %796 = vrot.lane.b32.xlu0 %v564, 113
          %v797 = vpop.permute.xlu0 %796
          %798 = vrot.lane.b32.xlu0 %v565, 113
          %v799 = vpop.permute.xlu0 %798
          %800 = vrot.lane.b32.xlu0 %v566, 113
          %v801 = vpop.permute.xlu0 %800
          %802 = vrot.lane.b32.xlu0 %v567, 113
          %v803 = vpop.permute.xlu0 %802
          %804 = vrot.lane.b32.xlu0 %v568, 113
          %v805 = vpop.permute.xlu0 %804
          %806 = vrot.lane.b32.xlu0 %v569, 113
          %v807 = vpop.permute.xlu0 %806
          %v808 = vsel %vm346, %v793, %v795
          %v809 = vsel %vm346, %v797, %v799
          %v810 = vsel %vm346, %v801, %v803
          %v811 = vsel %vm346, %v805, %v807
          %v820 = vsel %vm346, %v795, 0.0
          %v821 = vsel %vm346, %v799, 0.0
          %v822 = vsel %vm346, %v803, 0.0
          %v823 = vsel %vm346, %v807, 0.0
          %v824 = vsel %vm293, %v808, 0.0
          %v825 = vsel %vm294, %v820, 0.0
          %v826 = vsel %vm293, %v809, 0.0
          %v827 = vsel %vm294, %v821, 0.0
          %v828 = vsel %vm293, %v810, 0.0
          %v829 = vsel %vm294, %v822, 0.0
          %v830 = vsel %vm293, %v811, 0.0
          %v831 = vsel %vm294, %v823, 0.0
          %832 = vrot.lane.b32.xlu0 %v562, 112
          %v833 = vpop.permute.xlu0 %832
          %834 = vrot.lane.b32.xlu0 %v563, 112
          %v835 = vpop.permute.xlu0 %834
          %836 = vrot.lane.b32.xlu0 %v564, 112
          %v837 = vpop.permute.xlu0 %836
          %838 = vrot.lane.b32.xlu0 %v565, 112
          %v839 = vpop.permute.xlu0 %838
          %840 = vrot.lane.b32.xlu0 %v566, 112
          %v841 = vpop.permute.xlu0 %840
          %842 = vrot.lane.b32.xlu0 %v567, 112
          %v843 = vpop.permute.xlu0 %842
          %844 = vrot.lane.b32.xlu0 %v568, 112
          %v845 = vpop.permute.xlu0 %844
          %846 = vrot.lane.b32.xlu0 %v569, 112
          %v847 = vpop.permute.xlu0 %846
          %v848 = vsel %vm357, %v833, %v835
          %v849 = vsel %vm357, %v837, %v839
          %v850 = vsel %vm357, %v841, %v843
          %v851 = vsel %vm357, %v845, %v847
          %v860 = vsel %vm357, %v835, 0.0
          %v861 = vsel %vm357, %v839, 0.0
          %v862 = vsel %vm357, %v843, 0.0
          %v863 = vsel %vm357, %v847, 0.0
          %864 = vrot.lane.b32.xlu0 %v562, 111
          %v865 = vpop.permute.xlu0 %864
          %866 = vrot.lane.b32.xlu0 %v563, 111
          %v867 = vpop.permute.xlu0 %866
          %868 = vrot.lane.b32.xlu0 %v564, 111
          %v869 = vpop.permute.xlu0 %868
          %870 = vrot.lane.b32.xlu0 %v565, 111
          %v871 = vpop.permute.xlu0 %870
          %872 = vrot.lane.b32.xlu0 %v566, 111
          %v873 = vpop.permute.xlu0 %872
          %874 = vrot.lane.b32.xlu0 %v567, 111
          %v875 = vpop.permute.xlu0 %874
          %876 = vrot.lane.b32.xlu0 %v568, 111
          %v877 = vpop.permute.xlu0 %876
          %878 = vrot.lane.b32.xlu0 %v569, 111
          %v879 = vpop.permute.xlu0 %878
          %v880 = vsel %vm365, %v865, %v867
          %v881 = vsel %vm365, %v869, %v871
          %v882 = vsel %vm365, %v873, %v875
          %v883 = vsel %vm365, %v877, %v879
          %v892 = vsel %vm365, %v867, 0.0
          %v893 = vsel %vm365, %v871, 0.0
          %v894 = vsel %vm365, %v875, 0.0
          %v895 = vsel %vm365, %v879, 0.0
          %v896 = vsel %vm316, %v880, 0.0
          %v897 = vsel %vm317, %v892, 0.0
          %v898 = vsel %vm316, %v881, 0.0
          %v899 = vsel %vm317, %v893, 0.0
          %v900 = vsel %vm316, %v882, 0.0
          %v901 = vsel %vm317, %v894, 0.0
          %v902 = vsel %vm316, %v883, 0.0
          %v903 = vsel %vm317, %v895, 0.0
          %905 = vset.pattern.permute.xlu0 0
          %906 = vperm.xlu0 %905, %v588
          %v907 = vpop.permute.xlu0 %906
          %910 = vset.pattern.permute.xlu0 0
          %911 = vperm.xlu0 %910, %v589
          %v912 = vpop.permute.xlu0 %911
          %915 = vset.pattern.permute.xlu0 0
          %916 = vperm.xlu0 %915, %v590
          %v917 = vpop.permute.xlu0 %916
          %920 = vset.pattern.permute.xlu0 0
          %921 = vperm.xlu0 %920, %v591
          %v922 = vpop.permute.xlu0 %921
          %vm924 = vcmask 261120
          %v926 = vsel %vm924, %v576, 0
          %v929 = vsel %vm924, %v579, 0
          %v932 = vsel %vm924, %v582, 0
          %v935 = vsel %vm924, %v585, 0
          %937 = vmatprep.subr.mxu0 %v751
          %938 = vmatpush1.msra.mxu0 %v750
          %939 = vmatprep.subr.mxu0 %v749
          %940 = vmatpush1.msra.mxu0 %v748
          %941 = vmatprep.subr.mxu0 %v747
          %942 = vmatpush1.msra.mxu0 %v746
          %943 = vmatprep.subr.mxu0 %v745
          %944 = vmatpush1.msra.mxu0 %v744
          %945 = vmatprep.subr.mxu0 %v711
          %946 = vmatpush1.msra.mxu0 %v710
          %947 = vmatprep.subr.mxu0 %v709
          %948 = vmatpush1.msra.mxu0 %v708
          %949 = vmatprep.subr.mxu0 %v707
          %950 = vmatpush1.msra.mxu0 %v706
          %951 = vmatprep.subr.mxu0 %v705
          %952 = vmatpush1.msra.mxu0 %v704
          %953 = vmatprep.subr.mxu0 %v659
          %954 = vmatpush1.msra.mxu0 %v671
          %955 = vmatprep.subr.mxu0 %v658
          %956 = vmatpush1.msra.mxu0 %v670
          %957 = vmatprep.subr.mxu0 %v657
          %958 = vmatpush1.msra.mxu0 %v669
          %959 = vmatprep.subr.mxu0 %v656
          %960 = vmatpush1.msra.mxu0 %v668
          %961 = vmatprep.subr.mxu0 %v639
          %962 = vmatpush1.msra.mxu0 %v638
          %963 = vmatprep.subr.mxu0 %v637
          %964 = vmatpush1.msra.mxu0 %v636
          %965 = vmatprep.subr.mxu0 %v635
          %966 = vmatpush1.msra.mxu0 %v634
          %967 = vmatprep.subr.mxu0 %v633
          %968 = vmatpush1.msra.mxu0 %v632
          %969 = vmatprep.subr.mxu0 %v863
          %970 = vmatpush2.msra.mxu0 %v851
          %971 = vmatprep.subr.mxu0 %v862
          %972 = vmatpush2.msra.mxu0 %v850
          %973 = vmatprep.subr.mxu0 %v861
          %974 = vmatpush2.msra.mxu0 %v849
          %975 = vmatprep.subr.mxu0 %v860
          %976 = vmatpush2.msra.mxu0 %v848
          %977 = vmatprep.subr.mxu0 %v831
          %978 = vmatpush2.msra.mxu0 %v830
          %979 = vmatprep.subr.mxu0 %v829
          %980 = vmatpush2.msra.mxu0 %v828
          %981 = vmatprep.subr.mxu0 %v827
          %982 = vmatpush2.msra.mxu0 %v826
          %983 = vmatprep.subr.mxu0 %v825
          %984 = vmatpush2.msra.mxu0 %v824
          %985 = vmatprep.subr.mxu0 %v791
          %986 = vmatpush2.msra.mxu0 %v790
          %987 = vmatprep.subr.mxu0 %v789
          %988 = vmatpush2.msra.mxu0 %v788
          %989 = vmatprep.subr.mxu0 %v787
          %990 = vmatpush2.msra.mxu0 %v786
          %991 = vmatprep.subr.mxu0 %v785
          %992 = vmatpush2.msra.mxu0 %v784
          %993 = vmatprep.subr.mxu0 %v569
          %994 = vmatpush2.msra.mxu0 %v568
          %995 = vmatprep.subr.mxu0 %v567
          %996 = vmatpush2.msra.mxu0 %v566
          %997 = vmatprep.subr.mxu0 %v565
          %998 = vmatpush2.msra.mxu0 %v564
          %999 = vmatprep.subr.mxu0 %v563
          %1000 = vmatpush2.msra.mxu0 %v562
          %1001 = vmatprep.mubr.f32.mxu0 %v575
          %1002 = vmatmul.mubr.f32.gmra.mxu0 %v574
          %v1003 = vpop.f32.mrf.mxu0
          %v1004 = vadd.f32 %v907, %v1003
          %v1005 = vpop.f32.mrf.mxu0
          %v1006 = vadd.f32 %v907, %v1005
          %1007 = vmatprep.mubr.f32.mxu0 %v578
          %1008 = vmatmul.mubr.f32.gmra.mxu0 %v577
          %v1009 = vpop.f32.mrf.mxu0
          %v1010 = vadd.f32 %v912, %v1009
          %v1011 = vpop.f32.mrf.mxu0
          %v1012 = vadd.f32 %v912, %v1011
          %1013 = vmatprep.mubr.f32.mxu0 %v581
          %1014 = vmatmul.mubr.f32.gmra.mxu0 %v580
          %v1015 = vpop.f32.mrf.mxu0
          %v1016 = vadd.f32 %v917, %v1015
          %v1017 = vpop.f32.mrf.mxu0
          %v1018 = vadd.f32 %v917, %v1017
          %1019 = vmatprep.mubr.f32.mxu0 %v584
          %1020 = vmatmul.mubr.f32.gmra.mxu0 %v583
          %v1021 = vpop.f32.mrf.mxu0
          %v1022 = vadd.f32 %v922, %v1021
          %v1023 = vpop.f32.mrf.mxu0
          %v1024 = vadd.f32 %v922, %v1023
          %1025 = vdwg.mxu0
          %1026 = vmatprep.subr.mxu0 0.0
          %1027 = vmatpush1.msra.mxu0 0.0
          %1028 = vmatprep.subr.mxu0 0.0
          %1029 = vmatpush1.msra.mxu0 0.0
          %1030 = vmatprep.subr.mxu0 0.0
          %1031 = vmatpush1.msra.mxu0 0.0
          %1032 = vmatprep.subr.mxu0 0.0
          %1033 = vmatpush1.msra.mxu0 0.0
          %1034 = vmatprep.subr.mxu0 0.0
          %1035 = vmatpush1.msra.mxu0 0.0
          %1036 = vmatprep.subr.mxu0 0.0
          %1037 = vmatpush1.msra.mxu0 0.0
          %1038 = vmatprep.subr.mxu0 0.0
          %1039 = vmatpush1.msra.mxu0 0.0
          %1040 = vmatprep.subr.mxu0 0.0
          %1041 = vmatpush1.msra.mxu0 0.0
          %1042 = vmatprep.subr.mxu0 0.0
          %1043 = vmatpush1.msra.mxu0 0.0
          %1044 = vmatprep.subr.mxu0 0.0
          %1045 = vmatpush1.msra.mxu0 0.0
          %1046 = vmatprep.subr.mxu0 0.0
          %1047 = vmatpush1.msra.mxu0 0.0
          %1048 = vmatprep.subr.mxu0 0.0
          %1049 = vmatpush1.msra.mxu0 0.0
          %1050 = vmatprep.subr.mxu0 %v903
          %1051 = vmatpush1.msra.mxu0 %v902
          %1052 = vmatprep.subr.mxu0 %v901
          %1053 = vmatpush1.msra.mxu0 %v900
          %1054 = vmatprep.subr.mxu0 %v899
          %1055 = vmatpush1.msra.mxu0 %v898
          %1056 = vmatprep.subr.mxu0 %v897
          %1057 = vmatpush1.msra.mxu0 %v896
          %1058 = vmatprep.subr.mxu0 0.0
          %1059 = vmatpush2.msra.mxu0 0.0
          %1060 = vmatprep.subr.mxu0 0.0
          %1061 = vmatpush2.msra.mxu0 0.0
          %1062 = vmatprep.subr.mxu0 0.0
          %1063 = vmatpush2.msra.mxu0 0.0
          %1064 = vmatprep.subr.mxu0 0.0
          %1065 = vmatpush2.msra.mxu0 0.0
          %1066 = vmatprep.subr.mxu0 0.0
          %1067 = vmatpush2.msra.mxu0 0.0
          %1068 = vmatprep.subr.mxu0 0.0
          %1069 = vmatpush2.msra.mxu0 0.0
          %1070 = vmatprep.subr.mxu0 0.0
          %1071 = vmatpush2.msra.mxu0 0.0
          %1072 = vmatprep.subr.mxu0 0.0
          %1073 = vmatpush2.msra.mxu0 0.0
          %1074 = vmatprep.subr.mxu0 0.0
          %1075 = vmatpush2.msra.mxu0 0.0
          %1076 = vmatprep.subr.mxu0 0.0
          %1077 = vmatpush2.msra.mxu0 0.0
          %1078 = vmatprep.subr.mxu0 0.0
          %1079 = vmatpush2.msra.mxu0 0.0
          %1080 = vmatprep.subr.mxu0 0.0
          %1081 = vmatpush2.msra.mxu0 0.0
          %1082 = vmatprep.subr.mxu0 0.0
          %1083 = vmatpush2.msra.mxu0 0.0
          %1084 = vmatprep.subr.mxu0 0.0
          %1085 = vmatpush2.msra.mxu0 0.0
          %1086 = vmatprep.subr.mxu0 0.0
          %1087 = vmatpush2.msra.mxu0 0.0
          %1088 = vmatprep.subr.mxu0 0.0
          %1089 = vmatpush2.msra.mxu0 0.0
          %1090 = vmatprep.mubr.f32.mxu0 0.0
          %1091 = vmatmul.mubr.f32.gmra.mxu0 %v926
          %v1092 = vpop.f32.mrf.mxu0
          %v1093 = vadd.f32 %v1004, %v1092
          %v1094 = vpop.f32.mrf.mxu0
          %v1095 = vadd.f32 %v1006, %v1094
          %1096 = vmatprep.mubr.f32.mxu0 0.0
          %1097 = vmatmul.mubr.f32.gmra.mxu0 %v929
          %v1098 = vpop.f32.mrf.mxu0
          %v1099 = vadd.f32 %v1010, %v1098
          %v1100 = vpop.f32.mrf.mxu0
          %v1101 = vadd.f32 %v1012, %v1100
          %1102 = vmatprep.mubr.f32.mxu0 0.0
          %1103 = vmatmul.mubr.f32.gmra.mxu0 %v932
          %v1104 = vpop.f32.mrf.mxu0
          %v1105 = vadd.f32 %v1016, %v1104
          %v1106 = vpop.f32.mrf.mxu0
          %v1107 = vadd.f32 %v1018, %v1106
          %1108 = vmatprep.mubr.f32.mxu0 0.0
          %1109 = vmatmul.mubr.f32.gmra.mxu0 %v935
          %v1110 = vpop.f32.mrf.mxu0
          %v1111 = vadd.f32 %v1022, %v1110
          %v1112 = vpop.f32.mrf.mxu0
          %v1113 = vadd.f32 %v1024, %v1112
          %1114 = vdwg.mxu0
          %v1115 = vmax.f32 %v1093, 0.0
          %v1116 = vmax.f32 %v1095, 0.0
          %v1117 = vmax.f32 %v1099, 0.0
          %v1118 = vmax.f32 %v1101, 0.0
          %v1119 = vmax.f32 %v1105, 0.0
          %v1120 = vmax.f32 %v1107, 0.0
          %v1121 = vmax.f32 %v1111, 0.0
          %v1122 = vmax.f32 %v1113, 0.0
          %s1123 = sadd.s32 %s570, 1
          %s1124 = smul.u32 %s1123, 12
          %s1125 = smul.addr %s1124, 8
          %s1126 = scalar_lea.vmem [#allocation2], %s1125
          %v1127 = vld [vmem:[%s1126] sm:$0xff]
          %v1128 = vld [vmem:[%s1126 + $0x8] sm:$0xff]
          %v1129 = vld [vmem:[%s1126 + $0x10] sm:$0xff]
          %v1130 = vld [vmem:[%s1126 + $0x18] sm:$0xff]
          %v1131 = vld [vmem:[%s1126 + $0x20] sm:$0xff]
          %v1132 = vld [vmem:[%s1126 + $0x28] sm:$0xff]
          %v1133 = vld [vmem:[%s1126 + $0x30] sm:$0xff]
          %v1134 = vld [vmem:[%s1126 + $0x38] sm:$0xff]
          %v1135 = vld [vmem:[%s1126 + $0x40] sm:$0xff]
          %v1136 = vld [vmem:[%s1126 + $0x48] sm:$0xff]
          %v1137 = vld [vmem:[%s1126 + $0x50] sm:$0xff]
          %v1138 = vld [vmem:[%s1126 + $0x58] sm:$0xff]
          %s1139 = smul.u32 %s1123, 32
          %s1140 = scalar_lea.vmem %s4, %s1139
          %v1141 = vld [vmem:[%s1140] sm:$0xff]
          %v1142 = vld [vmem:[%s1140 + $0x8] sm:$0xff]
          %v1143 = vld [vmem:[%s1140 + $0x10] sm:$0xff]
          %v1144 = vld [vmem:[%s1140 + $0x18] sm:$0xff]
          %1153 = vrot.lane.b32.xlu0 %v1115, 17
          %v1154 = vpop.permute.xlu0 %1153
          %1155 = vrot.lane.b32.xlu0 %v1116, 17
          %v1156 = vpop.permute.xlu0 %1155
          %1157 = vrot.lane.b32.xlu0 %v1117, 17
          %v1158 = vpop.permute.xlu0 %1157
          %1159 = vrot.lane.b32.xlu0 %v1118, 17
          %v1160 = vpop.permute.xlu0 %1159
          %1161 = vrot.lane.b32.xlu0 %v1119, 17
          %v1162 = vpop.permute.xlu0 %1161
          %1163 = vrot.lane.b32.xlu0 %v1120, 17
          %v1164 = vpop.permute.xlu0 %1163
          %1165 = vrot.lane.b32.xlu0 %v1121, 17
          %v1166 = vpop.permute.xlu0 %1165
          %1167 = vrot.lane.b32.xlu0 %v1122, 17
          %v1168 = vpop.permute.xlu0 %1167
          %v1169 = vsel %vm286, %v1154, %v1156
          %v1170 = vsel %vm286, %v1158, %v1160
          %v1171 = vsel %vm286, %v1162, %v1164
          %v1172 = vsel %vm286, %v1166, %v1168
          %v1181 = vsel %vm286, 0.0, %v1154
          %v1182 = vsel %vm286, 0.0, %v1158
          %v1183 = vsel %vm286, 0.0, %v1162
          %v1184 = vsel %vm286, 0.0, %v1166
          %v1185 = vsel %vm293, %v1181, 0.0
          %v1186 = vsel %vm294, %v1169, 0.0
          %v1187 = vsel %vm293, %v1182, 0.0
          %v1188 = vsel %vm294, %v1170, 0.0
          %v1189 = vsel %vm293, %v1183, 0.0
          %v1190 = vsel %vm294, %v1171, 0.0
          %v1191 = vsel %vm293, %v1184, 0.0
          %v1192 = vsel %vm294, %v1172, 0.0
          %1193 = vrot.lane.b32.xlu0 %v1115, 16
          %v1194 = vpop.permute.xlu0 %1193
          %1195 = vrot.lane.b32.xlu0 %v1116, 16
          %v1196 = vpop.permute.xlu0 %1195
          %1197 = vrot.lane.b32.xlu0 %v1117, 16
          %v1198 = vpop.permute.xlu0 %1197
          %1199 = vrot.lane.b32.xlu0 %v1118, 16
          %v1200 = vpop.permute.xlu0 %1199
          %1201 = vrot.lane.b32.xlu0 %v1119, 16
          %v1202 = vpop.permute.xlu0 %1201
          %1203 = vrot.lane.b32.xlu0 %v1120, 16
          %v1204 = vpop.permute.xlu0 %1203
          %1205 = vrot.lane.b32.xlu0 %v1121, 16
          %v1206 = vpop.permute.xlu0 %1205
          %1207 = vrot.lane.b32.xlu0 %v1122, 16
          %v1208 = vpop.permute.xlu0 %1207
          %v1209 = vsel %vm301, %v1194, %v1196
          %v1210 = vsel %vm301, %v1198, %v1200
          %v1211 = vsel %vm301, %v1202, %v1204
          %v1212 = vsel %vm301, %v1206, %v1208
          %v1221 = vsel %vm301, 0.0, %v1194
          %v1222 = vsel %vm301, 0.0, %v1198
          %v1223 = vsel %vm301, 0.0, %v1202
          %v1224 = vsel %vm301, 0.0, %v1206
          %1225 = vrot.lane.b32.xlu0 %v1115, 15
          %v1226 = vpop.permute.xlu0 %1225
          %1227 = vrot.lane.b32.xlu0 %v1116, 15
          %v1228 = vpop.permute.xlu0 %1227
          %1229 = vrot.lane.b32.xlu0 %v1117, 15
          %v1230 = vpop.permute.xlu0 %1229
          %1231 = vrot.lane.b32.xlu0 %v1118, 15
          %v1232 = vpop.permute.xlu0 %1231
          %1233 = vrot.lane.b32.xlu0 %v1119, 15
          %v1234 = vpop.permute.xlu0 %1233
          %1235 = vrot.lane.b32.xlu0 %v1120, 15
          %v1236 = vpop.permute.xlu0 %1235
          %1237 = vrot.lane.b32.xlu0 %v1121, 15
          %v1238 = vpop.permute.xlu0 %1237
          %1239 = vrot.lane.b32.xlu0 %v1122, 15
          %v1240 = vpop.permute.xlu0 %1239
          %v1241 = vsel %vm309, %v1226, %v1228
          %v1242 = vsel %vm309, %v1230, %v1232
          %v1243 = vsel %vm309, %v1234, %v1236
          %v1244 = vsel %vm309, %v1238, %v1240
          %v1253 = vsel %vm309, 0.0, %v1226
          %v1254 = vsel %vm309, 0.0, %v1230
          %v1255 = vsel %vm309, 0.0, %v1234
          %v1256 = vsel %vm309, 0.0, %v1238
          %v1257 = vsel %vm316, %v1253, 0.0
          %v1258 = vsel %vm317, %v1241, 0.0
          %v1259 = vsel %vm316, %v1254, 0.0
          %v1260 = vsel %vm317, %v1242, 0.0
          %v1261 = vsel %vm316, %v1255, 0.0
          %v1262 = vsel %vm317, %v1243, 0.0
          %v1263 = vsel %vm316, %v1256, 0.0
          %v1264 = vsel %vm317, %v1244, 0.0
          %1265 = vrot.lane.b32.xlu0 %v1115, 1
          %v1266 = vpop.permute.xlu0 %1265
          %1267 = vrot.lane.b32.xlu0 %v1116, 1
          %v1268 = vpop.permute.xlu0 %1267
          %1269 = vrot.lane.b32.xlu0 %v1117, 1
          %v1270 = vpop.permute.xlu0 %1269
          %1271 = vrot.lane.b32.xlu0 %v1118, 1
          %v1272 = vpop.permute.xlu0 %1271
          %1273 = vrot.lane.b32.xlu0 %v1119, 1
          %v1274 = vpop.permute.xlu0 %1273
          %1275 = vrot.lane.b32.xlu0 %v1120, 1
          %v1276 = vpop.permute.xlu0 %1275
          %1277 = vrot.lane.b32.xlu0 %v1121, 1
          %v1278 = vpop.permute.xlu0 %1277
          %1279 = vrot.lane.b32.xlu0 %v1122, 1
          %v1280 = vpop.permute.xlu0 %1279
          %v1281 = vsel %vm324, %v1266, %v1268
          %v1282 = vsel %vm324, %v1270, %v1272
          %v1283 = vsel %vm324, %v1274, %v1276
          %v1284 = vsel %vm324, %v1278, %v1280
          %v1293 = vsel %vm324, 0.0, %v1266
          %v1294 = vsel %vm324, 0.0, %v1270
          %v1295 = vsel %vm324, 0.0, %v1274
          %v1296 = vsel %vm324, 0.0, %v1278
          %v1297 = vsel %vm293, %v1293, 0.0
          %v1298 = vsel %vm294, %v1281, 0.0
          %v1299 = vsel %vm293, %v1294, 0.0
          %v1300 = vsel %vm294, %v1282, 0.0
          %v1301 = vsel %vm293, %v1295, 0.0
          %v1302 = vsel %vm294, %v1283, 0.0
          %v1303 = vsel %vm293, %v1296, 0.0
          %v1304 = vsel %vm294, %v1284, 0.0
          %1305 = vrot.lane.b32.xlu0 %v1115, 127
          %v1306 = vpop.permute.xlu0 %1305
          %1307 = vrot.lane.b32.xlu0 %v1116, 127
          %v1308 = vpop.permute.xlu0 %1307
          %1309 = vrot.lane.b32.xlu0 %v1117, 127
          %v1310 = vpop.permute.xlu0 %1309
          %1311 = vrot.lane.b32.xlu0 %v1118, 127
          %v1312 = vpop.permute.xlu0 %1311
          %1313 = vrot.lane.b32.xlu0 %v1119, 127
          %v1314 = vpop.permute.xlu0 %1313
          %1315 = vrot.lane.b32.xlu0 %v1120, 127
          %v1316 = vpop.permute.xlu0 %1315
          %1317 = vrot.lane.b32.xlu0 %v1121, 127
          %v1318 = vpop.permute.xlu0 %1317
          %1319 = vrot.lane.b32.xlu0 %v1122, 127
          %v1320 = vpop.permute.xlu0 %1319
          %v1321 = vsel %vm335, %v1306, %v1308
          %v1322 = vsel %vm335, %v1310, %v1312
          %v1323 = vsel %vm335, %v1314, %v1316
          %v1324 = vsel %vm335, %v1318, %v1320
          %v1333 = vsel %vm335, %v1308, 0.0
          %v1334 = vsel %vm335, %v1312, 0.0
          %v1335 = vsel %vm335, %v1316, 0.0
          %v1336 = vsel %vm335, %v1320, 0.0
          %v1337 = vsel %vm316, %v1321, 0.0
          %v1338 = vsel %vm317, %v1333, 0.0
          %v1339 = vsel %vm316, %v1322, 0.0
          %v1340 = vsel %vm317, %v1334, 0.0
          %v1341 = vsel %vm316, %v1323, 0.0
          %v1342 = vsel %vm317, %v1335, 0.0
          %v1343 = vsel %vm316, %v1324, 0.0
          %v1344 = vsel %vm317, %v1336, 0.0
          %1345 = vrot.lane.b32.xlu0 %v1115, 113
          %v1346 = vpop.permute.xlu0 %1345
          %1347 = vrot.lane.b32.xlu0 %v1116, 113
          %v1348 = vpop.permute.xlu0 %1347
          %1349 = vrot.lane.b32.xlu0 %v1117, 113
          %v1350 = vpop.permute.xlu0 %1349
          %1351 = vrot.lane.b32.xlu0 %v1118, 113
          %v1352 = vpop.permute.xlu0 %1351
          %1353 = vrot.lane.b32.xlu0 %v1119, 113
          %v1354 = vpop.permute.xlu0 %1353
          %1355 = vrot.lane.b32.xlu0 %v1120, 113
          %v1356 = vpop.permute.xlu0 %1355
          %1357 = vrot.lane.b32.xlu0 %v1121, 113
          %v1358 = vpop.permute.xlu0 %1357
          %1359 = vrot.lane.b32.xlu0 %v1122, 113
          %v1360 = vpop.permute.xlu0 %1359
          %v1361 = vsel %vm346, %v1346, %v1348
          %v1362 = vsel %vm346, %v1350, %v1352
          %v1363 = vsel %vm346, %v1354, %v1356
          %v1364 = vsel %vm346, %v1358, %v1360
          %v1373 = vsel %vm346, %v1348, 0.0
          %v1374 = vsel %vm346, %v1352, 0.0
          %v1375 = vsel %vm346, %v1356, 0.0
          %v1376 = vsel %vm346, %v1360, 0.0
          %v1377 = vsel %vm293, %v1361, 0.0
          %v1378 = vsel %vm294, %v1373, 0.0
          %v1379 = vsel %vm293, %v1362, 0.0
          %v1380 = vsel %vm294, %v1374, 0.0
          %v1381 = vsel %vm293, %v1363, 0.0
          %v1382 = vsel %vm294, %v1375, 0.0
          %v1383 = vsel %vm293, %v1364, 0.0
          %v1384 = vsel %vm294, %v1376, 0.0
          %1385 = vrot.lane.b32.xlu0 %v1115, 112
          %v1386 = vpop.permute.xlu0 %1385
          %1387 = vrot.lane.b32.xlu0 %v1116, 112
          %v1388 = vpop.permute.xlu0 %1387
          %1389 = vrot.lane.b32.xlu0 %v1117, 112
          %v1390 = vpop.permute.xlu0 %1389
          %1391 = vrot.lane.b32.xlu0 %v1118, 112
          %v1392 = vpop.permute.xlu0 %1391
          %1393 = vrot.lane.b32.xlu0 %v1119, 112
          %v1394 = vpop.permute.xlu0 %1393
          %1395 = vrot.lane.b32.xlu0 %v1120, 112
          %v1396 = vpop.permute.xlu0 %1395
          %1397 = vrot.lane.b32.xlu0 %v1121, 112
          %v1398 = vpop.permute.xlu0 %1397
          %1399 = vrot.lane.b32.xlu0 %v1122, 112
          %v1400 = vpop.permute.xlu0 %1399
          %v1401 = vsel %vm357, %v1386, %v1388
          %v1402 = vsel %vm357, %v1390, %v1392
          %v1403 = vsel %vm357, %v1394, %v1396
          %v1404 = vsel %vm357, %v1398, %v1400
          %v1413 = vsel %vm357, %v1388, 0.0
          %v1414 = vsel %vm357, %v1392, 0.0
          %v1415 = vsel %vm357, %v1396, 0.0
          %v1416 = vsel %vm357, %v1400, 0.0
          %1417 = vrot.lane.b32.xlu0 %v1115, 111
          %v1418 = vpop.permute.xlu0 %1417
          %1419 = vrot.lane.b32.xlu0 %v1116, 111
          %v1420 = vpop.permute.xlu0 %1419
          %1421 = vrot.lane.b32.xlu0 %v1117, 111
          %v1422 = vpop.permute.xlu0 %1421
          %1423 = vrot.lane.b32.xlu0 %v1118, 111
          %v1424 = vpop.permute.xlu0 %1423
          %1425 = vrot.lane.b32.xlu0 %v1119, 111
          %v1426 = vpop.permute.xlu0 %1425
          %1427 = vrot.lane.b32.xlu0 %v1120, 111
          %v1428 = vpop.permute.xlu0 %1427
          %1429 = vrot.lane.b32.xlu0 %v1121, 111
          %v1430 = vpop.permute.xlu0 %1429
          %1431 = vrot.lane.b32.xlu0 %v1122, 111
          %v1432 = vpop.permute.xlu0 %1431
          %v1433 = vsel %vm365, %v1418, %v1420
          %v1434 = vsel %vm365, %v1422, %v1424
          %v1435 = vsel %vm365, %v1426, %v1428
          %v1436 = vsel %vm365, %v1430, %v1432
          %v1445 = vsel %vm365, %v1420, 0.0
          %v1446 = vsel %vm365, %v1424, 0.0
          %v1447 = vsel %vm365, %v1428, 0.0
          %v1448 = vsel %vm365, %v1432, 0.0
          %v1449 = vsel %vm316, %v1433, 0.0
          %v1450 = vsel %vm317, %v1445, 0.0
          %v1451 = vsel %vm316, %v1434, 0.0
          %v1452 = vsel %vm317, %v1446, 0.0
          %v1453 = vsel %vm316, %v1435, 0.0
          %v1454 = vsel %vm317, %v1447, 0.0
          %v1455 = vsel %vm316, %v1436, 0.0
          %v1456 = vsel %vm317, %v1448, 0.0
          %1458 = vset.pattern.permute.xlu0 0
          %1459 = vperm.xlu0 %1458, %v1141
          %v1460 = vpop.permute.xlu0 %1459
          %1463 = vset.pattern.permute.xlu0 0
          %1464 = vperm.xlu0 %1463, %v1142
          %v1465 = vpop.permute.xlu0 %1464
          %1468 = vset.pattern.permute.xlu0 0
          %1469 = vperm.xlu0 %1468, %v1143
          %v1470 = vpop.permute.xlu0 %1469
          %1473 = vset.pattern.permute.xlu0 0
          %1474 = vperm.xlu0 %1473, %v1144
          %v1475 = vpop.permute.xlu0 %1474
          %v1478 = vsel %vm924, %v1129, 0
          %v1481 = vsel %vm924, %v1132, 0
          %v1484 = vsel %vm924, %v1135, 0
          %v1487 = vsel %vm924, %v1138, 0
          %1489 = vmatprep.subr.mxu0 %v1304
          %1490 = vmatpush1.msra.mxu0 %v1303
          %1491 = vmatprep.subr.mxu0 %v1302
          %1492 = vmatpush1.msra.mxu0 %v1301
          %1493 = vmatprep.subr.mxu0 %v1300
          %1494 = vmatpush1.msra.mxu0 %v1299
          %1495 = vmatprep.subr.mxu0 %v1298
          %1496 = vmatpush1.msra.mxu0 %v1297
          %1497 = vmatprep.subr.mxu0 %v1264
          %1498 = vmatpush1.msra.mxu0 %v1263
          %1499 = vmatprep.subr.mxu0 %v1262
          %1500 = vmatpush1.msra.mxu0 %v1261
          %1501 = vmatprep.subr.mxu0 %v1260
          %1502 = vmatpush1.msra.mxu0 %v1259
          %1503 = vmatprep.subr.mxu0 %v1258
          %1504 = vmatpush1.msra.mxu0 %v1257
          %1505 = vmatprep.subr.mxu0 %v1212
          %1506 = vmatpush1.msra.mxu0 %v1224
          %1507 = vmatprep.subr.mxu0 %v1211
          %1508 = vmatpush1.msra.mxu0 %v1223
          %1509 = vmatprep.subr.mxu0 %v1210
          %1510 = vmatpush1.msra.mxu0 %v1222
          %1511 = vmatprep.subr.mxu0 %v1209
          %1512 = vmatpush1.msra.mxu0 %v1221
          %1513 = vmatprep.subr.mxu0 %v1192
          %1514 = vmatpush1.msra.mxu0 %v1191
          %1515 = vmatprep.subr.mxu0 %v1190
          %1516 = vmatpush1.msra.mxu0 %v1189
          %1517 = vmatprep.subr.mxu0 %v1188
          %1518 = vmatpush1.msra.mxu0 %v1187
          %1519 = vmatprep.subr.mxu0 %v1186
          %1520 = vmatpush1.msra.mxu0 %v1185
          %1521 = vmatprep.subr.mxu0 %v1416
          %1522 = vmatpush2.msra.mxu0 %v1404
          %1523 = vmatprep.subr.mxu0 %v1415
          %1524 = vmatpush2.msra.mxu0 %v1403
          %1525 = vmatprep.subr.mxu0 %v1414
          %1526 = vmatpush2.msra.mxu0 %v1402
          %1527 = vmatprep.subr.mxu0 %v1413
          %1528 = vmatpush2.msra.mxu0 %v1401
          %1529 = vmatprep.subr.mxu0 %v1384
          %1530 = vmatpush2.msra.mxu0 %v1383
          %1531 = vmatprep.subr.mxu0 %v1382
          %1532 = vmatpush2.msra.mxu0 %v1381
          %1533 = vmatprep.subr.mxu0 %v1380
          %1534 = vmatpush2.msra.mxu0 %v1379
          %1535 = vmatprep.subr.mxu0 %v1378
          %1536 = vmatpush2.msra.mxu0 %v1377
          %1537 = vmatprep.subr.mxu0 %v1344
          %1538 = vmatpush2.msra.mxu0 %v1343
          %1539 = vmatprep.subr.mxu0 %v1342
          %1540 = vmatpush2.msra.mxu0 %v1341
          %1541 = vmatprep.subr.mxu0 %v1340
          %1542 = vmatpush2.msra.mxu0 %v1339
          %1543 = vmatprep.subr.mxu0 %v1338
          %1544 = vmatpush2.msra.mxu0 %v1337
          %1545 = vmatprep.subr.mxu0 %v1122
          %1546 = vmatpush2.msra.mxu0 %v1121
          %1547 = vmatprep.subr.mxu0 %v1120
          %1548 = vmatpush2.msra.mxu0 %v1119
          %1549 = vmatprep.subr.mxu0 %v1118
          %1550 = vmatpush2.msra.mxu0 %v1117
          %1551 = vmatprep.subr.mxu0 %v1116
          %1552 = vmatpush2.msra.mxu0 %v1115
          %1553 = vmatprep.mubr.f32.mxu0 %v1128
          %1554 = vmatmul.mubr.f32.gmra.mxu0 %v1127
          %v1555 = vpop.f32.mrf.mxu0
          %v1556 = vadd.f32 %v1460, %v1555
          %v1557 = vpop.f32.mrf.mxu0
          %v1558 = vadd.f32 %v1460, %v1557
          %1559 = vmatprep.mubr.f32.mxu0 %v1131
          %1560 = vmatmul.mubr.f32.gmra.mxu0 %v1130
          %v1561 = vpop.f32.mrf.mxu0
          %v1562 = vadd.f32 %v1465, %v1561
          %v1563 = vpop.f32.mrf.mxu0
          %v1564 = vadd.f32 %v1465, %v1563
          %1565 = vmatprep.mubr.f32.mxu0 %v1134
          %1566 = vmatmul.mubr.f32.gmra.mxu0 %v1133
          %v1567 = vpop.f32.mrf.mxu0
          %v1568 = vadd.f32 %v1470, %v1567
          %v1569 = vpop.f32.mrf.mxu0
          %v1570 = vadd.f32 %v1470, %v1569
          %1571 = vmatprep.mubr.f32.mxu0 %v1137
          %1572 = vmatmul.mubr.f32.gmra.mxu0 %v1136
          %v1573 = vpop.f32.mrf.mxu0
          %v1574 = vadd.f32 %v1475, %v1573
          %v1575 = vpop.f32.mrf.mxu0
          %v1576 = vadd.f32 %v1475, %v1575
          %1577 = vdwg.mxu0
          %1578 = vmatprep.subr.mxu0 0.0
          %1579 = vmatpush1.msra.mxu0 0.0
          %1580 = vmatprep.subr.mxu0 0.0
          %1581 = vmatpush1.msra.mxu0 0.0
          %1582 = vmatprep.subr.mxu0 0.0
          %1583 = vmatpush1.msra.mxu0 0.0
          %1584 = vmatprep.subr.mxu0 0.0
          %1585 = vmatpush1.msra.mxu0 0.0
          %1586 = vmatprep.subr.mxu0 0.0
          %1587 = vmatpush1.msra.mxu0 0.0
          %1588 = vmatprep.subr.mxu0 0.0
          %1589 = vmatpush1.msra.mxu0 0.0
          %1590 = vmatprep.subr.mxu0 0.0
          %1591 = vmatpush1.msra.mxu0 0.0
          %1592 = vmatprep.subr.mxu0 0.0
          %1593 = vmatpush1.msra.mxu0 0.0
          %1594 = vmatprep.subr.mxu0 0.0
          %1595 = vmatpush1.msra.mxu0 0.0
          %1596 = vmatprep.subr.mxu0 0.0
          %1597 = vmatpush1.msra.mxu0 0.0
          %1598 = vmatprep.subr.mxu0 0.0
          %1599 = vmatpush1.msra.mxu0 0.0
          %1600 = vmatprep.subr.mxu0 0.0
          %1601 = vmatpush1.msra.mxu0 0.0
          %1602 = vmatprep.subr.mxu0 %v1456
          %1603 = vmatpush1.msra.mxu0 %v1455
          %1604 = vmatprep.subr.mxu0 %v1454
          %1605 = vmatpush1.msra.mxu0 %v1453
          %1606 = vmatprep.subr.mxu0 %v1452
          %1607 = vmatpush1.msra.mxu0 %v1451
          %1608 = vmatprep.subr.mxu0 %v1450
          %1609 = vmatpush1.msra.mxu0 %v1449
          %1610 = vmatprep.subr.mxu0 0.0
          %1611 = vmatpush2.msra.mxu0 0.0
          %1612 = vmatprep.subr.mxu0 0.0
          %1613 = vmatpush2.msra.mxu0 0.0
          %1614 = vmatprep.subr.mxu0 0.0
          %1615 = vmatpush2.msra.mxu0 0.0
          %1616 = vmatprep.subr.mxu0 0.0
          %1617 = vmatpush2.msra.mxu0 0.0
          %1618 = vmatprep.subr.mxu0 0.0
          %1619 = vmatpush2.msra.mxu0 0.0
          %1620 = vmatprep.subr.mxu0 0.0
          %1621 = vmatpush2.msra.mxu0 0.0
          %1622 = vmatprep.subr.mxu0 0.0
          %1623 = vmatpush2.msra.mxu0 0.0
          %1624 = vmatprep.subr.mxu0 0.0
          %1625 = vmatpush2.msra.mxu0 0.0
          %1626 = vmatprep.subr.mxu0 0.0
          %1627 = vmatpush2.msra.mxu0 0.0
          %1628 = vmatprep.subr.mxu0 0.0
          %1629 = vmatpush2.msra.mxu0 0.0
          %1630 = vmatprep.subr.mxu0 0.0
          %1631 = vmatpush2.msra.mxu0 0.0
          %1632 = vmatprep.subr.mxu0 0.0
          %1633 = vmatpush2.msra.mxu0 0.0
          %1634 = vmatprep.subr.mxu0 0.0
          %1635 = vmatpush2.msra.mxu0 0.0
          %1636 = vmatprep.subr.mxu0 0.0
          %1637 = vmatpush2.msra.mxu0 0.0
          %1638 = vmatprep.subr.mxu0 0.0
          %1639 = vmatpush2.msra.mxu0 0.0
          %1640 = vmatprep.subr.mxu0 0.0
          %1641 = vmatpush2.msra.mxu0 0.0
          %1642 = vmatprep.mubr.f32.mxu0 0.0
          %1643 = vmatmul.mubr.f32.gmra.mxu0 %v1478
          %v1644 = vpop.f32.mrf.mxu0
          %v1645 = vadd.f32 %v1556, %v1644
          %v1646 = vpop.f32.mrf.mxu0
          %v1647 = vadd.f32 %v1558, %v1646
          %1648 = vmatprep.mubr.f32.mxu0 0.0
          %1649 = vmatmul.mubr.f32.gmra.mxu0 %v1481
          %v1650 = vpop.f32.mrf.mxu0
          %v1651 = vadd.f32 %v1562, %v1650
          %v1652 = vpop.f32.mrf.mxu0
          %v1653 = vadd.f32 %v1564, %v1652
          %1654 = vmatprep.mubr.f32.mxu0 0.0
          %1655 = vmatmul.mubr.f32.gmra.mxu0 %v1484
          %v1656 = vpop.f32.mrf.mxu0
          %v1657 = vadd.f32 %v1568, %v1656
          %v1658 = vpop.f32.mrf.mxu0
          %v1659 = vadd.f32 %v1570, %v1658
          %1660 = vmatprep.mubr.f32.mxu0 0.0
          %1661 = vmatmul.mubr.f32.gmra.mxu0 %v1487
          %v1662 = vpop.f32.mrf.mxu0
          %v1663 = vadd.f32 %v1574, %v1662
          %v1664 = vpop.f32.mrf.mxu0
          %v1665 = vadd.f32 %v1576, %v1664
          %1666 = vdwg.mxu0
          %v1667 = vadd.f32 %v562, %v1645
          %v1668 = vadd.f32 %v563, %v1647
          %v1669 = vadd.f32 %v564, %v1651
          %v1670 = vadd.f32 %v565, %v1653
          %v1671 = vadd.f32 %v566, %v1657
          %v1672 = vadd.f32 %v567, %v1659
          %v1673 = vadd.f32 %v568, %v1663
          %v1674 = vadd.f32 %v569, %v1665
        $region49: #{residual_blocks_with_input_conv.1} parent=39 // loop_footer
          %s561 = sadd.s32 1, %s557
        $region50: #{residual_blocks_with_input_conv.1} parent=39 // loop_footer_branch
          %556 = sbr.rel target = $region46
        $region51: #{residual_blocks_with_input_conv.1} parent=39 // loop_exit
          _
        %1675 = vst [vmem:[%s239] sm:$0xff] %v562
        %1676 = vst [vmem:[%s239 + $0x8] sm:$0xff] %v563
        %1677 = vst [vmem:[%s239 + $0x10] sm:$0xff] %v564
        %1678 = vst [vmem:[%s239 + $0x18] sm:$0xff] %v565
        %1679 = vst [vmem:[%s239 + $0x20] sm:$0xff] %v566
        %1680 = vst [vmem:[%s239 + $0x28] sm:$0xff] %v567
        %1681 = vst [vmem:[%s239 + $0x30] sm:$0xff] %v568
        %1682 = vst [vmem:[%s239 + $0x38] sm:$0xff] %v569
        %p1683 = scmp.lt.s32.totalorder %s17, 1
        %s1684 = scalar_select %p1683, %s17, 1
        %s1685 = smul.addr %s1684, 8
        %s1686 = smul.addr %s1685, 8
        %s1687 = scalar_lea.vmem %s5, %s1686
        // Predicated region
        $region52: #{residual_blocks_with_input_conv.1} parent=39 // pred_check
          %p1688 = pneg %p145
        $region53: #{residual_blocks_with_input_conv.1} parent=39 // pred_check_branch
          %1690 = sbr.rel (%p1688) target = $region55
        $region54: #{residual_blocks_with_input_conv.1} parent=39 // pred_region
          _
        $region55: #{residual_blocks_with_input_conv.1} parent=39 // pred_fallthru
          _
      $region40: #{residual_blocks_with_input_conv.1} parent=5 // pred_fallthru
        _
      %p1691 = scmp.le.s32.totalorder 2, %s12
      // Predicated region
      $region56: #{residual_blocks_with_input_conv.1} parent=5 // pred_check
        %p1692 = pneg %p1691
      $region57: #{residual_blocks_with_input_conv.1} parent=5 // pred_check_branch
        %1694 = sbr.rel (%p1692) target = $region59
      $region58: #{residual_blocks_with_input_conv.1} parent=5 // pred_region
        %s1695 = ssub.s32 %s12, 2
        // Predicated region
        $region60: #{residual_blocks_with_input_conv.1} parent=58 // pred_check
          %p1696 = pneg %p151
        $region61: #{residual_blocks_with_input_conv.1} parent=58 // pred_check_branch
          %1698 = sbr.rel (%p1696) target = $region63
        $region62: #{residual_blocks_with_input_conv.1} parent=58 // pred_region
          %p1699 = scmp.lt.s32.totalorder %s18, 1
          %s1700 = scalar_select %p1699, %s18, 1
          %s1701 = smul.addr %s1700, 8
          %s1702 = smul.addr %s1701, 8
          %s1703 = scalar_lea.vmem %s5, %s1702
        $region63: #{residual_blocks_with_input_conv.1} parent=58 // pred_fallthru
          _
      $region59: #{residual_blocks_with_input_conv.1} parent=5 // pred_fallthru
        _
    $region6: #{residual_blocks_with_input_conv.1} parent=1 // loop_footer
      %s16 = sadd.s32 1, %s12
    $region7: #{residual_blocks_with_input_conv.1} parent=1 // loop_footer_branch
      %11 = sbr.rel target = $region3
    $region8: #{residual_blocks_with_input_conv.1} parent=1 // loop_exit
      _
    %1704 = vsyncpa [#allocation3], 1
    %s1705 = scalar_lea.sflag [#allocation3], 1
    %1706 = vsyncpa %s1705, 1

</llo_original>
